<compile_context>
chip_gen: v7x
topology: tpu7x:2x2x1
jax: 0.10.0
libtpu: 0.0.40
codegen_flags: <defaults>
</compile_context>

<pallas_src>
import functools

import jax
import jax.numpy as jnp
from jax.experimental import pallas as pl
from jax.experimental.pallas import tpu as pltpu

EPS = 1e-5                      # PyTorch BatchNorm2d default
LANE = 128                      # TPU lane width
DEFAULT_TILE_M = 512            # rows per grid step (clamped to M)
VMEM_LIMIT = 48 * 1024 * 1024   # explicit budget; safe on v7x (64 MiB VMEM)


def _round_up(x, m):
    return (x + m - 1) // m * m


# ---------------------------------------------------------------------------
# Pass 1: tiled matmul (bf16 MXU inputs, f32 accumulation) + BN partial stats
# ---------------------------------------------------------------------------
def _matmul_stats_kernel(p_ref, w_ref, y_ref, sum_ref, sq_ref):
    y = jnp.dot(p_ref[...], w_ref[...], preferred_element_type=jnp.float32)
    y_ref[...] = y
    tm, c = y.shape
    yr = y.reshape(tm // 8, 8, c)            # group rows by sublane: VPU-only reduce
    sum_ref[...] = jnp.sum(yr, axis=0)       # (8, Cpad) partial channel sums
    sq_ref[...] = jnp.sum(yr * yr, axis=0)   # (8, Cpad) partial sums of squares


def _matmul_with_stats(patches, w, tile_m):
    mpad, K = patches.shape
    cpad = w.shape[1]
    ntiles = mpad // tile_m
    return pl.pallas_call(
        _matmul_stats_kernel,
        out_shape=(
            jax.ShapeDtypeStruct((mpad, cpad), jnp.float32),
            jax.ShapeDtypeStruct((ntiles * 8, cpad), jnp.float32),
            jax.ShapeDtypeStruct((ntiles * 8, cpad), jnp.float32),
        ),
        grid=(ntiles,),
        in_specs=[
            pl.BlockSpec((tile_m, K), lambda i: (i, 0)),
            pl.BlockSpec((K, cpad), lambda i: (0, 0)),   # weights resident
        ],
        out_specs=(
            pl.BlockSpec((tile_m, cpad), lambda i: (i, 0)),
            pl.BlockSpec((8, cpad), lambda i: (i, 0)),
            pl.BlockSpec((8, cpad), lambda i: (i, 0)),
        ),
        compiler_params=pltpu.CompilerParams(
            dimension_semantics=("parallel",),
            vmem_limit_bytes=VMEM_LIMIT,
        ),
    )(patches, w)


# ---------------------------------------------------------------------------
# Pass 2 kernels: normalize (precomputed scale/shift) (+ residual-BN) (+ ReLU)
# ---------------------------------------------------------------------------
def _affine_kernel(y_ref, scale_ref, shift_ref, out_ref, *, relu):
    y = y_ref[...] * scale_ref[...] + shift_ref[...]
    if relu:
        y = jnp.maximum(y, 0.0)
    out_ref[...] = y.astype(out_ref.dtype)


def _affine_addbn_relu_kernel(y_ref, scale_ref, shift_ref,
                              res_ref, rscale_ref, rshift_ref, out_ref):
    main = y_ref[...] * scale_ref[...] + shift_ref[...]
    short = res_ref[...].astype(jnp.float32) * rscale_ref[...] + rshift_ref[...]
    out_ref[...] = jnp.maximum(main + short, 0.0).astype(out_ref.dtype)


def _affine_pass(y, scale, shift, tile_m, *, relu, out_dtype=jnp.float32):
    mpad, cpad = y.shape
    ntiles = mpad // tile_m
    row_spec = pl.BlockSpec((tile_m, cpad), lambda i: (i, 0))
    vec_spec = pl.BlockSpec((1, cpad), lambda i: (0, 0))
    return pl.pallas_call(
        functools.partial(_affine_kernel, relu=relu),
        out_shape=jax.ShapeDtypeStruct((mpad, cpad), out_dtype),
        grid=(ntiles,),
        in_specs=[row_spec, vec_spec, vec_spec],
        out_specs=row_spec,
        compiler_params=pltpu.CompilerParams(
            dimension_semantics=("parallel",),
            vmem_limit_bytes=VMEM_LIMIT,
        ),
    )(y, scale, shift)


def _fused_output_pass(y, scale, shift, res, rscale, rshift, tile_m):
    """out = relu((y*scale+shift) + (res*rscale+rshift)) — BN on both branches
    plus the residual add plus ReLU in one memory pass."""
    mpad, cpad = y.shape
    ntiles = mpad // tile_m
    row_spec = pl.BlockSpec((tile_m, cpad), lambda i: (i, 0))
    vec_spec = pl.BlockSpec((1, cpad), lambda i: (0, 0))
    return pl.pallas_call(
        _affine_addbn_relu_kernel,
        out_shape=jax.ShapeDtypeStruct((mpad, cpad), jnp.float32),
        grid=(ntiles,),
        in_specs=[row_spec, vec_spec, vec_spec, row_spec, vec_spec, vec_spec],
        out_specs=row_spec,
        compiler_params=pltpu.CompilerParams(
            dimension_semantics=("parallel",),
            vmem_limit_bytes=VMEM_LIMIT,
        ),
    )(y, scale, shift, res, rscale, rshift)


# ---------------------------------------------------------------------------
# Glue: im2col, conv+stats wrapper, BN scale/shift, parameter init, forward
# ---------------------------------------------------------------------------
def im2col(x, k, stride, pad):
    """x: (N, H, W, C) NHWC -> (N*Ho*Wo, k*k*C) patches (row-major kh, kw, C)."""
    # TODO(synk): build patches inside the kernel (shifted pl.ds slices of an
    # NHWC tile, or a kh*kw grid axis accumulating into an f32 scratch) to
    # avoid the k*k HBM inflation; matters most on v5e's lower HBM bandwidth.
    if pad:
        x = jnp.pad(x, ((0, 0), (pad, pad), (pad, pad), (0, 0)))
    N, Hp, Wp, C = x.shape
    Ho = (Hp - k) // stride + 1
    Wo = (Wp - k) // stride + 1
    cols = []
    for di in range(k):
        for dj in range(k):
            cols.append(
                x[:, di:di + stride * (Ho - 1) + 1:stride,
                     dj:dj + stride * (Wo - 1) + 1:stride, :])
    p = jnp.concatenate(cols, axis=-1)
    return p.reshape(N * Ho * Wo, k * k * C), (N, Ho, Wo)


def conv_with_stats(x_nhwc, w_hwio, stride, pad, tile_m=DEFAULT_TILE_M):
    """im2col conv via tiled MXU matmul; returns raw conv output plus global
    BN statistics (deferred normalization).

    Returns: y (Mpad, Cpad) f32, mean (Cpad,), var (Cpad,), M, Cpad,
             (N, Ho, Wo), tile.  Cpad = round_up(Cout, 128).
    """
    kh, kw, cin, cout = w_hwio.shape
    patches, (N, Ho, Wo) = im2col(x_nhwc, kh, stride, pad)
    M, K = patches.shape
    cpad = _round_up(cout, LANE)
    tile = min(tile_m, _round_up(M, 8))
    mpad = _round_up(M, tile)

    # bf16 MXU inputs (v6e/v7x peak throughput, half the DMA bytes); f32
    # accumulation via preferred_element_type.  Zero row/channel padding is
    # stats-neutral (adds 0 to sums; we divide by the real M).
    p = jnp.pad(patches.astype(jnp.bfloat16), ((0, mpad - M), (0, 0)))
    w2d = jnp.pad(w_hwio.reshape(K, cout).astype(jnp.bfloat16),
                  ((0, 0), (0, cpad - cout)))

    y, psum, psq = _matmul_with_stats(p, w2d, tile)

    # Global BN statistics (f32, tiny (ntiles*8, Cpad) reductions outside the
    # kernel).  Single-pass var = E[y^2] - E[y]^2, clamped for safety.
    mean = jnp.sum(psum, axis=0) / M
    var = jnp.maximum(jnp.sum(psq, axis=0) / M - mean * mean, 0.0)
    return y, mean, var, M, cpad, (N, Ho, Wo), tile


def bn_scale_shift(gamma, beta, mean, var, cout, cpad):
    g = jnp.pad(gamma.astype(jnp.float32), (0, cpad - cout), constant_values=1.0)
    b = jnp.pad(beta.astype(jnp.float32), (0, cpad - cout))
    scale = g * jax.lax.rsqrt(var + EPS)
    shift = b - mean * scale
    return scale.reshape(1, cpad), shift.reshape(1, cpad)


def init_params(key, in_channels, out_channels, kernel_size):
    k1, k2 = kernel_size
    ci1, ci2 = in_channels
    co1, co2 = out_channels
    ks = jax.random.split(key, 10)
    p = {
        "w1": 0.1 * jax.random.normal(ks[0], (k1, k1, ci1, co1), jnp.float32),
        "b1": 0.1 * jax.random.normal(ks[1], (co1,), jnp.float32),
        "g1": 1.0 + 0.1 * jax.random.normal(ks[2], (co1,), jnp.float32),
        "be1": 0.1 * jax.random.normal(ks[3], (co1,), jnp.float32),
        "w2": 0.1 * jax.random.normal(ks[4], (k2, k2, ci2, co2), jnp.float32),
        "b2": 0.1 * jax.random.normal(ks[5], (co2,), jnp.float32),
        "g2": 1.0 + 0.1 * jax.random.normal(ks[6], (co2,), jnp.float32),
        "be2": 0.1 * jax.random.normal(ks[7], (co2,), jnp.float32),
    }
    if ci1 != co2:  # projection shortcut: 1x1 conv (no bias) + BN
        p["ws"] = 0.1 * jax.random.normal(ks[8], (1, 1, ci1, co2), jnp.float32)
        kg, kb = jax.random.split(ks[9])
        p["gs"] = 1.0 + 0.1 * jax.random.normal(kg, (co2,), jnp.float32)
        p["bes"] = 0.1 * jax.random.normal(kb, (co2,), jnp.float32)
    return p


def resblock2_forward(x_nchw, params, strides, kernel_size):
    s1, s2 = strides
    k1, k2 = kernel_size
    # PyTorch-facing NCHW -> NHWC (channel-last = lane-friendly).
    # TODO(synk): accept/produce NHWC end-to-end to drop these two transposes.
    x = jnp.transpose(x_nchw, (0, 2, 3, 1)).astype(jnp.float32)

    ci1 = params["w1"].shape[-2]
    co1 = params["w1"].shape[-1]
    co2 = params["w2"].shape[-1]
    cpad2 = _round_up(co2, LANE)

    # Shortcut branch: raw 1x1-conv matmul output + deferred BN (its affine is
    # folded into conv2's output pass — no extra elementwise pallas_call).
    if "ws" in params:
        ys, mean_s, var_s, Ms, cpad_s, _, _ = conv_with_stats(
            x, params["ws"], stride=s1, pad=0)
        rscale, rshift = bn_scale_shift(params["gs"], params["bes"],
                                        mean_s, var_s, co2, cpad_s)
        res = ys
    else:
        if s1 != 1 or s2 != 1 or ci1 != co2:
            raise ValueError(
                "identity shortcut requires stride (1,1) and matching channels")
        N, H, W, C = x.shape
        res = jnp.pad(x.reshape(N * H * W, C), ((0, 0), (0, cpad2 - C)))
        rscale = jnp.ones((1, cpad2), jnp.float32)
        rshift = jnp.zeros((1, cpad2), jnp.float32)

    # conv1 + bn1 + relu  (activation emitted in bf16: it is consumed as bf16
    # MXU input for conv2 anyway, so numerics are unchanged and HBM bytes halve)
    y1, mean1, var1, M1, cpad1, (N, H1, W1), tile1 = conv_with_stats(
        x, params["w1"], stride=s1, pad=k1 // 2)
    scale1, shift1 = bn_scale_shift(params["g1"], params["be1"],
                                    mean1, var1, co1, cpad1)
    h2d = _affine_pass(y1, scale1, shift1, tile1, relu=True,
                       out_dtype=jnp.bfloat16)
    h = h2d[:M1, :co1].reshape(N, H1, W1, co1)   # drop channel/row padding

    # conv2 + bn2 + shortcut(bn) add + relu, all fused in one output pass
    y2, mean2, var2, M2, cpad_o, (N, H2, W2), tile2 = conv_with_stats(
        h, params["w2"], stride=s2, pad=k2 // 2)
    scale2, shift2 = bn_scale_shift(params["g2"], params["be2"],
                                    mean2, var2, co2, cpad_o)
    mpad2 = y2.shape[0]
    if res.shape[0] != mpad2:
        res = jnp.pad(res, ((0, mpad2 - res.shape[0]), (0, 0)))
    o2d = _fused_output_pass(y2, scale2, shift2, res, rscale, rshift, tile2)

    out = o2d[:M2, :co2].reshape(N, H2, W2, co2)
    return jnp.transpose(out, (0, 3, 1, 2))    # back to NCHW


# ---------------------------------------------------------------------------
# Pure-JAX reference (lax.conv, f32, includes the conv bias) for checking
# ---------------------------------------------------------------------------
def ref_forward(x_nchw, params, strides, kernel_size):
    s1, s2 = strides
    k1, k2 = kernel_size
    x = jnp.transpose(x_nchw, (0, 2, 3, 1)).astype(jnp.float32)

    def conv(inp, w, stride, pad):
        return jax.lax.conv_general_dilated(
            inp, w, (stride, stride), [(pad, pad), (pad, pad)],
            dimension_numbers=("NHWC", "HWIO", "NHWC"),
            precision=jax.lax.Precision.HIGHEST)

    def bn(y, g, b):
        mean = jnp.mean(y, axis=(0, 1, 2), keepdims=True)
        var = jnp.mean(jnp.square(y - mean), axis=(0, 1, 2), keepdims=True)
        return g * (y - mean) * jax.lax.rsqrt(var + EPS) + b

    h = jax.nn.relu(bn(conv(x, params["w1"], s1, k1 // 2) + params["b1"],
                       params["g1"], params["be1"]))
    o = bn(conv(h, params["w2"], s2, k2 // 2) + params["b2"],
           params["g2"], params["be2"])
    if "ws" in params:
        sc = bn(conv(x, params["ws"], s1, 0), params["gs"], params["bes"])
    else:
        sc = x
    return jnp.transpose(jax.nn.relu(o + sc), (0, 3, 1, 2))


# TODO(synk): BatchNorm running_mean/running_var buffer updates (training-side
# effect) are not materialized; forward output does not depend on them.

if __name__ == "__main__":
    in_channels = (4, 8)
    out_channels = (8, 8)
    strides = (2, 1)
    kernel_size = (3, 3)

    key = jax.random.PRNGKey(0)
    kx, kp = jax.random.split(key)
    x = jax.random.normal(kx, (2, 4, 16, 16), jnp.float32)  # NCHW like PyTorch
    params = init_params(kp, in_channels, out_channels, kernel_size)

    fwd = jax.jit(functools.partial(resblock2_forward,
                                    strides=strides, kernel_size=kernel_size))
    out = jax.block_until_ready(fwd(x, params))

    ref = jax.block_until_ready(ref_forward(x, params, strides, kernel_size))
    assert out.shape == (2, 8, 8, 8), out.shape
    # Tolerance accounts for bf16 MXU inputs (reference is f32 HIGHEST).
    max_err = float(jnp.max(jnp.abs(out - ref)))
    mean_err = float(jnp.mean(jnp.abs(out - ref)))
    assert max_err < 5e-2, f"mismatch vs reference: max {max_err}"
    assert mean_err < 2e-2, f"mismatch vs reference: mean {mean_err}"

    print("KERNEL_OK")
</pallas_src>

<mosaic_0001>
module attributes {stable_mosaic.version = 11 : i64} {
  func.func @_matmul_stats_kernel(%arg0: i32, %arg1: memref<128x4xbf16, #tpu.memory_space<vmem>>, %arg2: memref<4x128xbf16, #tpu.memory_space<vmem>>, %arg3: memref<128x128xf32, #tpu.memory_space<vmem>>, %arg4: memref<8x128xf32, #tpu.memory_space<vmem>>, %arg5: memref<8x128xf32, #tpu.memory_space<vmem>>) attributes {dimension_semantics = [#tpu.dimension_semantics<parallel>], iteration_bounds = array<i64: 1>, scalar_prefetch = 0 : i64, scratch_operands = 0 : i64, tpu.core_type = #tpu.core_type<tc>, window_params = [{transform_indices = @transform_0, window_bounds = array<i64: 128, 4>}, {pipeline_mode = #tpu.pipeline_mode<synchronous>, transform_indices = @transform_1, window_bounds = array<i64: 4, 128>}, {transform_indices = @transform_2, window_bounds = array<i64: 128, 128>}, {transform_indices = @transform_3, window_bounds = array<i64: 8, 128>}, {transform_indices = @transform_4, window_bounds = array<i64: 8, 128>}]} {
    %c0 = arith.constant 0 : index
    %c0_0 = arith.constant 0 : index
    %0 = vector.load %arg1[%c0, %c0_0] : memref<128x4xbf16, #tpu.memory_space<vmem>>, vector<128x4xbf16>
    %c0_1 = arith.constant 0 : index
    %c0_2 = arith.constant 0 : index
    %1 = vector.load %arg2[%c0_1, %c0_2] : memref<4x128xbf16, #tpu.memory_space<vmem>>, vector<4x128xbf16>
    %cst = arith.constant dense<0.000000e+00> : vector<128x128xf32>
    %2 = tpu.matmul %0, %1, %cst {dimension_numbers = #tpu.dot_dimension_numbers<[1], [0], [0], [1], [0, 0, 1, 1], [], []>} : vector<128x4xbf16>, vector<4x128xbf16>, vector<128x128xf32> -> vector<128x128xf32>
    %c0_3 = arith.constant 0 : index
    %c0_4 = arith.constant 0 : index
    %3 = vector.load %arg3[%c0_3, %c0_4] : memref<128x128xf32, #tpu.memory_space<vmem>>, vector<128x128xf32>
    tpu.vector_store %arg3[%c0_3, %c0_4], %2 {strides = array<i32>} : memref<128x128xf32, #tpu.memory_space<vmem>>, vector<128x128xf32>,
    %4 = vector.shape_cast %2 : vector<128x128xf32> to vector<16x8x128xf32>
    %cst_5 = arith.constant dense<0.000000e+00> : vector<8x128xf32>
    %5 = vector.multi_reduction <add>, %4, %cst_5 [0] : vector<16x8x128xf32> to vector<8x128xf32>
    %c0_6 = arith.constant 0 : index
    %c0_7 = arith.constant 0 : index
    %6 = vector.load %arg4[%c0_6, %c0_7] : memref<8x128xf32, #tpu.memory_space<vmem>>, vector<8x128xf32>
    tpu.vector_store %arg4[%c0_6, %c0_7], %5 {strides = array<i32>} : memref<8x128xf32, #tpu.memory_space<vmem>>, vector<8x128xf32>,
    %7 = arith.mulf %4, %4 : vector<16x8x128xf32>
    %cst_8 = arith.constant dense<0.000000e+00> : vector<8x128xf32>
    %8 = vector.multi_reduction <add>, %7, %cst_8 [0] : vector<16x8x128xf32> to vector<8x128xf32>
    %c0_9 = arith.constant 0 : index
    %c0_10 = arith.constant 0 : index
    %9 = vector.load %arg5[%c0_9, %c0_10] : memref<8x128xf32, #tpu.memory_space<vmem>>, vector<8x128xf32>
    tpu.vector_store %arg5[%c0_9, %c0_10], %8 {strides = array<i32>} : memref<8x128xf32, #tpu.memory_space<vmem>>, vector<8x128xf32>,
    return
  }
  func.func @transform_0(%arg0: i32) -> (i32, i32) {
    %c0_i32 = arith.constant 0 : i32
    %c0_i32_0 = arith.constant 0 : i32
    return %arg0, %c0_i32 : i32, i32
  }
  func.func @transform_1(%arg0: i32) -> (i32, i32) {
    %c0_i32 = arith.constant 0 : i32
    %c0_i32_0 = arith.constant 0 : i32
    %c0_i32_1 = arith.constant 0 : i32
    return %c0_i32, %c0_i32_0 : i32, i32
  }
  func.func @transform_2(%arg0: i32) -> (i32, i32) {
    %c0_i32 = arith.constant 0 : i32
    %c0_i32_0 = arith.constant 0 : i32
    return %arg0, %c0_i32 : i32, i32
  }
  func.func @transform_3(%arg0: i32) -> (i32, i32) {
    %c0_i32 = arith.constant 0 : i32
    %c0_i32_0 = arith.constant 0 : i32
    return %arg0, %c0_i32 : i32, i32
  }
  func.func @transform_4(%arg0: i32) -> (i32, i32) {
    %c0_i32 = arith.constant 0 : i32
    %c0_i32_0 = arith.constant 0 : i32
    return %arg0, %c0_i32 : i32, i32
  }
}

module attributes {stable_mosaic.version = 11 : i64} {
  func.func @_matmul_stats_kernel(%arg0: i32, %arg1: memref<128x36xbf16, #tpu.memory_space<vmem>>, %arg2: memref<36x128xbf16, #tpu.memory_space<vmem>>, %arg3: memref<128x128xf32, #tpu.memory_space<vmem>>, %arg4: memref<8x128xf32, #tpu.memory_space<vmem>>, %arg5: memref<8x128xf32, #tpu.memory_space<vmem>>) attributes {dimension_semantics = [#tpu.dimension_semantics<parallel>], iteration_bounds = array<i64: 1>, scalar_prefetch = 0 : i64, scratch_operands = 0 : i64, tpu.core_type = #tpu.core_type<tc>, window_params = [{transform_indices = @transform_0, window_bounds = array<i64: 128, 36>}, {pipeline_mode = #tpu.pipeline_mode<synchronous>, transform_indices = @transform_1, window_bounds = array<i64: 36, 128>}, {transform_indices = @transform_2, window_bounds = array<i64: 128, 128>}, {transform_indices = @transform_3, window_bounds = array<i64: 8, 128>}, {transform_indices = @transform_4, window_bounds = array<i64: 8, 128>}]} {
    %c0 = arith.constant 0 : index
    %c0_0 = arith.constant 0 : index
    %0 = vector.load %arg1[%c0, %c0_0] : memref<128x36xbf16, #tpu.memory_space<vmem>>, vector<128x36xbf16>
    %c0_1 = arith.constant 0 : index
    %c0_2 = arith.constant 0 : index
    %1 = vector.load %arg2[%c0_1, %c0_2] : memref<36x128xbf16, #tpu.memory_space<vmem>>, vector<36x128xbf16>
    %cst = arith.constant dense<0.000000e+00> : vector<128x128xf32>
    %2 = tpu.matmul %0, %1, %cst {dimension_numbers = #tpu.dot_dimension_numbers<[1], [0], [0], [1], [0, 0, 1, 1], [], []>} : vector<128x36xbf16>, vector<36x128xbf16>, vector<128x128xf32> -> vector<128x128xf32>
    %c0_3 = arith.constant 0 : index
    %c0_4 = arith.constant 0 : index
    %3 = vector.load %arg3[%c0_3, %c0_4] : memref<128x128xf32, #tpu.memory_space<vmem>>, vector<128x128xf32>
    tpu.vector_store %arg3[%c0_3, %c0_4], %2 {strides = array<i32>} : memref<128x128xf32, #tpu.memory_space<vmem>>, vector<128x128xf32>,
    %4 = vector.shape_cast %2 : vector<128x128xf32> to vector<16x8x128xf32>
    %cst_5 = arith.constant dense<0.000000e+00> : vector<8x128xf32>
    %5 = vector.multi_reduction <add>, %4, %cst_5 [0] : vector<16x8x128xf32> to vector<8x128xf32>
    %c0_6 = arith.constant 0 : index
    %c0_7 = arith.constant 0 : index
    %6 = vector.load %arg4[%c0_6, %c0_7] : memref<8x128xf32, #tpu.memory_space<vmem>>, vector<8x128xf32>
    tpu.vector_store %arg4[%c0_6, %c0_7], %5 {strides = array<i32>} : memref<8x128xf32, #tpu.memory_space<vmem>>, vector<8x128xf32>,
    %7 = arith.mulf %4, %4 : vector<16x8x128xf32>
    %cst_8 = arith.constant dense<0.000000e+00> : vector<8x128xf32>
    %8 = vector.multi_reduction <add>, %7, %cst_8 [0] : vector<16x8x128xf32> to vector<8x128xf32>
    %c0_9 = arith.constant 0 : index
    %c0_10 = arith.constant 0 : index
    %9 = vector.load %arg5[%c0_9, %c0_10] : memref<8x128xf32, #tpu.memory_space<vmem>>, vector<8x128xf32>
    tpu.vector_store %arg5[%c0_9, %c0_10], %8 {strides = array<i32>} : memref<8x128xf32, #tpu.memory_space<vmem>>, vector<8x128xf32>,
    return
  }
  func.func @transform_0(%arg0: i32) -> (i32, i32) {
    %c0_i32 = arith.constant 0 : i32
    %c0_i32_0 = arith.constant 0 : i32
    return %arg0, %c0_i32 : i32, i32
  }
  func.func @transform_1(%arg0: i32) -> (i32, i32) {
    %c0_i32 = arith.constant 0 : i32
    %c0_i32_0 = arith.constant 0 : i32
    %c0_i32_1 = arith.constant 0 : i32
    return %c0_i32, %c0_i32_0 : i32, i32
  }
  func.func @transform_2(%arg0: i32) -> (i32, i32) {
    %c0_i32 = arith.constant 0 : i32
    %c0_i32_0 = arith.constant 0 : i32
    return %arg0, %c0_i32 : i32, i32
  }
  func.func @transform_3(%arg0: i32) -> (i32, i32) {
    %c0_i32 = arith.constant 0 : i32
    %c0_i32_0 = arith.constant 0 : i32
    return %arg0, %c0_i32 : i32, i32
  }
  func.func @transform_4(%arg0: i32) -> (i32, i32) {
    %c0_i32 = arith.constant 0 : i32
    %c0_i32_0 = arith.constant 0 : i32
    return %arg0, %c0_i32 : i32, i32
  }
}

module attributes {stable_mosaic.version = 11 : i64} {
  func.func @_affine_kernel(%arg0: i32, %arg1: memref<128x128xf32, #tpu.memory_space<vmem>>, %arg2: memref<1x128xf32, #tpu.memory_space<vmem>>, %arg3: memref<1x128xf32, #tpu.memory_space<vmem>>, %arg4: memref<128x128xbf16, #tpu.memory_space<vmem>>) attributes {dimension_semantics = [#tpu.dimension_semantics<parallel>], iteration_bounds = array<i64: 1>, scalar_prefetch = 0 : i64, scratch_operands = 0 : i64, tpu.core_type = #tpu.core_type<tc>, window_params = [{transform_indices = @transform_0, window_bounds = array<i64: 128, 128>}, {pipeline_mode = #tpu.pipeline_mode<synchronous>, transform_indices = @transform_1, window_bounds = array<i64: 1, 128>}, {pipeline_mode = #tpu.pipeline_mode<synchronous>, transform_indices = @transform_2, window_bounds = array<i64: 1, 128>}, {transform_indices = @transform_3, window_bounds = array<i64: 128, 128>}]} {
    %c0 = arith.constant 0 : index
    %c0_0 = arith.constant 0 : index
    %0 = vector.load %arg1[%c0, %c0_0] : memref<128x128xf32, #tpu.memory_space<vmem>>, vector<128x128xf32>
    %c0_1 = arith.constant 0 : index
    %c0_2 = arith.constant 0 : index
    %1 = vector.load %arg2[%c0_1, %c0_2] : memref<1x128xf32, #tpu.memory_space<vmem>>, vector<1x128xf32>
    %2 = vector.broadcast %1 : vector<1x128xf32> to vector<128x128xf32>
    %3 = arith.mulf %0, %2 : vector<128x128xf32>
    %c0_3 = arith.constant 0 : index
    %c0_4 = arith.constant 0 : index
    %4 = vector.load %arg3[%c0_3, %c0_4] : memref<1x128xf32, #tpu.memory_space<vmem>>, vector<1x128xf32>
    %5 = vector.broadcast %4 : vector<1x128xf32> to vector<128x128xf32>
    %6 = arith.addf %3, %5 : vector<128x128xf32>
    %cst = arith.constant 0.000000e+00 : f32
    %7 = vector.broadcast %cst : f32 to vector<128x128xf32>
    %8 = arith.maximumf %6, %7 : vector<128x128xf32>
    %9 = arith.truncf %8 : vector<128x128xf32> to vector<128x128xbf16>
    %c0_5 = arith.constant 0 : index
    %c0_6 = arith.constant 0 : index
    %10 = vector.load %arg4[%c0_5, %c0_6] : memref<128x128xbf16, #tpu.memory_space<vmem>>, vector<128x128xbf16>
    tpu.vector_store %arg4[%c0_5, %c0_6], %9 {strides = array<i32>} : memref<128x128xbf16, #tpu.memory_space<vmem>>, vector<128x128xbf16>,
    return
  }
  func.func @transform_0(%arg0: i32) -> (i32, i32) {
    %c0_i32 = arith.constant 0 : i32
    %c0_i32_0 = arith.constant 0 : i32
    return %arg0, %c0_i32 : i32, i32
  }
  func.func @transform_1(%arg0: i32) -> (i32, i32) {
    %c0_i32 = arith.constant 0 : i32
    %c0_i32_0 = arith.constant 0 : i32
    %c0_i32_1 = arith.constant 0 : i32
    return %c0_i32, %c0_i32_0 : i32, i32
  }
  func.func @transform_2(%arg0: i32) -> (i32, i32) {
    %c0_i32 = arith.constant 0 : i32
    %c0_i32_0 = arith.constant 0 : i32
    %c0_i32_1 = arith.constant 0 : i32
    return %c0_i32, %c0_i32_0 : i32, i32
  }
  func.func @transform_3(%arg0: i32) -> (i32, i32) {
    %c0_i32 = arith.constant 0 : i32
    %c0_i32_0 = arith.constant 0 : i32
    return %arg0, %c0_i32 : i32, i32
  }
}

module attributes {stable_mosaic.version = 11 : i64} {
  func.func @_matmul_stats_kernel(%arg0: i32, %arg1: memref<128x72xbf16, #tpu.memory_space<vmem>>, %arg2: memref<72x128xbf16, #tpu.memory_space<vmem>>, %arg3: memref<128x128xf32, #tpu.memory_space<vmem>>, %arg4: memref<8x128xf32, #tpu.memory_space<vmem>>, %arg5: memref<8x128xf32, #tpu.memory_space<vmem>>) attributes {dimension_semantics = [#tpu.dimension_semantics<parallel>], iteration_bounds = array<i64: 1>, scalar_prefetch = 0 : i64, scratch_operands = 0 : i64, tpu.core_type = #tpu.core_type<tc>, window_params = [{transform_indices = @transform_0, window_bounds = array<i64: 128, 72>}, {pipeline_mode = #tpu.pipeline_mode<synchronous>, transform_indices = @transform_1, window_bounds = array<i64: 72, 128>}, {transform_indices = @transform_2, window_bounds = array<i64: 128, 128>}, {transform_indices = @transform_3, window_bounds = array<i64: 8, 128>}, {transform_indices = @transform_4, window_bounds = array<i64: 8, 128>}]} {
    %c0 = arith.constant 0 : index
    %c0_0 = arith.constant 0 : index
    %0 = vector.load %arg1[%c0, %c0_0] : memref<128x72xbf16, #tpu.memory_space<vmem>>, vector<128x72xbf16>
    %c0_1 = arith.constant 0 : index
    %c0_2 = arith.constant 0 : index
    %1 = vector.load %arg2[%c0_1, %c0_2] : memref<72x128xbf16, #tpu.memory_space<vmem>>, vector<72x128xbf16>
    %cst = arith.constant dense<0.000000e+00> : vector<128x128xf32>
    %2 = tpu.matmul %0, %1, %cst {dimension_numbers = #tpu.dot_dimension_numbers<[1], [0], [0], [1], [0, 0, 1, 1], [], []>} : vector<128x72xbf16>, vector<72x128xbf16>, vector<128x128xf32> -> vector<128x128xf32>
    %c0_3 = arith.constant 0 : index
    %c0_4 = arith.constant 0 : index
    %3 = vector.load %arg3[%c0_3, %c0_4] : memref<128x128xf32, #tpu.memory_space<vmem>>, vector<128x128xf32>
    tpu.vector_store %arg3[%c0_3, %c0_4], %2 {strides = array<i32>} : memref<128x128xf32, #tpu.memory_space<vmem>>, vector<128x128xf32>,
    %4 = vector.shape_cast %2 : vector<128x128xf32> to vector<16x8x128xf32>
    %cst_5 = arith.constant dense<0.000000e+00> : vector<8x128xf32>
    %5 = vector.multi_reduction <add>, %4, %cst_5 [0] : vector<16x8x128xf32> to vector<8x128xf32>
    %c0_6 = arith.constant 0 : index
    %c0_7 = arith.constant 0 : index
    %6 = vector.load %arg4[%c0_6, %c0_7] : memref<8x128xf32, #tpu.memory_space<vmem>>, vector<8x128xf32>
    tpu.vector_store %arg4[%c0_6, %c0_7], %5 {strides = array<i32>} : memref<8x128xf32, #tpu.memory_space<vmem>>, vector<8x128xf32>,
    %7 = arith.mulf %4, %4 : vector<16x8x128xf32>
    %cst_8 = arith.constant dense<0.000000e+00> : vector<8x128xf32>
    %8 = vector.multi_reduction <add>, %7, %cst_8 [0] : vector<16x8x128xf32> to vector<8x128xf32>
    %c0_9 = arith.constant 0 : index
    %c0_10 = arith.constant 0 : index
    %9 = vector.load %arg5[%c0_9, %c0_10] : memref<8x128xf32, #tpu.memory_space<vmem>>, vector<8x128xf32>
    tpu.vector_store %arg5[%c0_9, %c0_10], %8 {strides = array<i32>} : memref<8x128xf32, #tpu.memory_space<vmem>>, vector<8x128xf32>,
    return
  }
  func.func @transform_0(%arg0: i32) -> (i32, i32) {
    %c0_i32 = arith.constant 0 : i32
    %c0_i32_0 = arith.constant 0 : i32
    return %arg0, %c0_i32 : i32, i32
  }
  func.func @transform_1(%arg0: i32) -> (i32, i32) {
    %c0_i32 = arith.constant 0 : i32
    %c0_i32_0 = arith.constant 0 : i32
    %c0_i32_1 = arith.constant 0 : i32
    return %c0_i32, %c0_i32_0 : i32, i32
  }
  func.func @transform_2(%arg0: i32) -> (i32, i32) {
    %c0_i32 = arith.constant 0 : i32
    %c0_i32_0 = arith.constant 0 : i32
    return %arg0, %c0_i32 : i32, i32
  }
  func.func @transform_3(%arg0: i32) -> (i32, i32) {
    %c0_i32 = arith.constant 0 : i32
    %c0_i32_0 = arith.constant 0 : i32
    return %arg0, %c0_i32 : i32, i32
  }
  func.func @transform_4(%arg0: i32) -> (i32, i32) {
    %c0_i32 = arith.constant 0 : i32
    %c0_i32_0 = arith.constant 0 : i32
    return %arg0, %c0_i32 : i32, i32
  }
}

module attributes {stable_mosaic.version = 11 : i64} {
  func.func @_affine_addbn_relu_kernel(%arg0: i32, %arg1: memref<128x128xf32, #tpu.memory_space<vmem>>, %arg2: memref<1x128xf32, #tpu.memory_space<vmem>>, %arg3: memref<1x128xf32, #tpu.memory_space<vmem>>, %arg4: memref<128x128xf32, #tpu.memory_space<vmem>>, %arg5: memref<1x128xf32, #tpu.memory_space<vmem>>, %arg6: memref<1x128xf32, #tpu.memory_space<vmem>>, %arg7: memref<128x128xf32, #tpu.memory_space<vmem>>) attributes {dimension_semantics = [#tpu.dimension_semantics<parallel>], iteration_bounds = array<i64: 1>, scalar_prefetch = 0 : i64, scratch_operands = 0 : i64, tpu.core_type = #tpu.core_type<tc>, window_params = [{transform_indices = @transform_0, window_bounds = array<i64: 128, 128>}, {pipeline_mode = #tpu.pipeline_mode<synchronous>, transform_indices = @transform_1, window_bounds = array<i64: 1, 128>}, {pipeline_mode = #tpu.pipeline_mode<synchronous>, transform_indices = @transform_2, window_bounds = array<i64: 1, 128>}, {transform_indices = @transform_3, window_bounds = array<i64: 128, 128>}, {pipeline_mode = #tpu.pipeline_mode<synchronous>, transform_indices = @transform_4, window_bounds = array<i64: 1, 128>}, {pipeline_mode = #tpu.pipeline_mode<synchronous>, transform_indices = @transform_5, window_bounds = array<i64: 1, 128>}, {transform_indices = @transform_6, window_bounds = array<i64: 128, 128>}]} {
    %c0 = arith.constant 0 : index
    %c0_0 = arith.constant 0 : index
    %0 = vector.load %arg1[%c0, %c0_0] : memref<128x128xf32, #tpu.memory_space<vmem>>, vector<128x128xf32>
    %c0_1 = arith.constant 0 : index
    %c0_2 = arith.constant 0 : index
    %1 = vector.load %arg2[%c0_1, %c0_2] : memref<1x128xf32, #tpu.memory_space<vmem>>, vector<1x128xf32>
    %2 = vector.broadcast %1 : vector<1x128xf32> to vector<128x128xf32>
    %3 = arith.mulf %0, %2 : vector<128x128xf32>
    %c0_3 = arith.constant 0 : index
    %c0_4 = arith.constant 0 : index
    %4 = vector.load %arg3[%c0_3, %c0_4] : memref<1x128xf32, #tpu.memory_space<vmem>>, vector<1x128xf32>
    %5 = vector.broadcast %4 : vector<1x128xf32> to vector<128x128xf32>
    %6 = arith.addf %3, %5 : vector<128x128xf32>
    %c0_5 = arith.constant 0 : index
    %c0_6 = arith.constant 0 : index
    %7 = vector.load %arg4[%c0_5, %c0_6] : memref<128x128xf32, #tpu.memory_space<vmem>>, vector<128x128xf32>
    %c0_7 = arith.constant 0 : index
    %c0_8 = arith.constant 0 : index
    %8 = vector.load %arg5[%c0_7, %c0_8] : memref<1x128xf32, #tpu.memory_space<vmem>>, vector<1x128xf32>
    %9 = vector.broadcast %8 : vector<1x128xf32> to vector<128x128xf32>
    %10 = arith.mulf %7, %9 : vector<128x128xf32>
    %c0_9 = arith.constant 0 : index
    %c0_10 = arith.constant 0 : index
    %11 = vector.load %arg6[%c0_9, %c0_10] : memref<1x128xf32, #tpu.memory_space<vmem>>, vector<1x128xf32>
    %12 = vector.broadcast %11 : vector<1x128xf32> to vector<128x128xf32>
    %13 = arith.addf %10, %12 : vector<128x128xf32>
    %14 = arith.addf %6, %13 : vector<128x128xf32>
    %cst = arith.constant 0.000000e+00 : f32
    %15 = vector.broadcast %cst : f32 to vector<128x128xf32>
    %16 = arith.maximumf %14, %15 : vector<128x128xf32>
    %c0_11 = arith.constant 0 : index
    %c0_12 = arith.constant 0 : index
    %17 = vector.load %arg7[%c0_11, %c0_12] : memref<128x128xf32, #tpu.memory_space<vmem>>, vector<128x128xf32>
    tpu.vector_store %arg7[%c0_11, %c0_12], %16 {strides = array<i32>} : memref<128x128xf32, #tpu.memory_space<vmem>>, vector<128x128xf32>,
    return
  }
  func.func @transform_0(%arg0: i32) -> (i32, i32) {
    %c0_i32 = arith.constant 0 : i32
    %c0_i32_0 = arith.constant 0 : i32
    return %arg0, %c0_i32 : i32, i32
  }
  func.func @transform_1(%arg0: i32) -> (i32, i32) {
    %c0_i32 = arith.constant 0 : i32
    %c0_i32_0 = arith.constant 0 : i32
    %c0_i32_1 = arith.constant 0 : i32
    return %c0_i32, %c0_i32_0 : i32, i32
  }
  func.func @transform_2(%arg0: i32) -> (i32, i32) {
    %c0_i32 = arith.constant 0 : i32
    %c0_i32_0 = arith.constant 0 : i32
    %c0_i32_1 = arith.constant 0 : i32
    return %c0_i32, %c0_i32_0 : i32, i32
  }
  func.func @transform_3(%arg0: i32) -> (i32, i32) {
    %c0_i32 = arith.constant 0 : i32
    %c0_i32_0 = arith.constant 0 : i32
    return %arg0, %c0_i32 : i32, i32
  }
  func.func @transform_4(%arg0: i32) -> (i32, i32) {
    %c0_i32 = arith.constant 0 : i32
    %c0_i32_0 = arith.constant 0 : i32
    %c0_i32_1 = arith.constant 0 : i32
    return %c0_i32, %c0_i32_0 : i32, i32
  }
  func.func @transform_5(%arg0: i32) -> (i32, i32) {
    %c0_i32 = arith.constant 0 : i32
    %c0_i32_0 = arith.constant 0 : i32
    %c0_i32_1 = arith.constant 0 : i32
    return %c0_i32, %c0_i32_0 : i32, i32
  }
  func.func @transform_6(%arg0: i32) -> (i32, i32) {
    %c0_i32 = arith.constant 0 : i32
    %c0_i32_0 = arith.constant 0 : i32
    return %arg0, %c0_i32 : i32, i32
  }
}

</mosaic_0001>

<llo_original>
// kernel: resblock2_forward.5
$region0: #{resblock2_forward.5}
  #allocation0 [shape = 'u32[]', space=smem, size = 0x4, offset = 0x4, fixed_abs, tag = 'smem constant byte address 0x4 - core index']
  #allocation1 [shape = 'u32[144,128]{1,0:T(1,128)}', space=vmem, size = 0x12000, scoped, tag = 'internal scratch']
  %s0 = inlined_call_operand.vmem [shape: bf16[128,4], index: 0, kind: input, shape index: {}]
  %s1 = inlined_call_operand.vmem [shape: bf16[4,128], index: 1, kind: input, shape index: {}]
  %s2 = inlined_call_operand.vmem [shape: f32[128,128], index: 2, kind: output, shape index: {0}]
  %s3 = inlined_call_operand.vmem [shape: f32[8,128], index: 3, kind: output, shape index: {1}]
  %s4 = inlined_call_operand.vmem [shape: f32[8,128], index: 4, kind: output, shape index: {2}]
  %5 = xla_tuple %s2, %s3, %s4
  %s6 = sld [smem:[#allocation0]]
  $region34: #{resblock2_forward.5} parent=0
    _
  %s8 = ssub.s32 1, %s6
  %s9 = scalar_select 0, %s8, %s6
  // Predicated region
  $region2: #{resblock2_forward.5} parent=0 // pred_check
    _
  $region3: #{resblock2_forward.5} parent=0 // pred_check_branch
    %11 = sbr.rel (0) target = $region5
  $region4: #{resblock2_forward.5} parent=0 // pred_region
    _
  $region5: #{resblock2_forward.5} parent=0 // pred_fallthru
    _
  // Predicated region
  $region6: #{resblock2_forward.5} parent=0 // pred_check
    _
  $region7: #{resblock2_forward.5} parent=0 // pred_check_branch
    %13 = sbr.rel (0) target = $region9
  $region8: #{resblock2_forward.5} parent=0 // pred_region
    _
  $region9: #{resblock2_forward.5} parent=0 // pred_fallthru
    _
  %v15 = vld [vmem:[%s0] sm:$0xf]
  %v16 = vld [vmem:[%s0 + $0x4] sm:$0xf]
  %v17 = vld [vmem:[%s0 + $0x8] sm:$0xf]
  %v18 = vld [vmem:[%s0 + $0xc] sm:$0xf]
  %v19 = vld [vmem:[%s0 + $0x10] sm:$0xf]
  %v20 = vld [vmem:[%s0 + $0x14] sm:$0xf]
  %v21 = vld [vmem:[%s0 + $0x18] sm:$0xf]
  %v22 = vld [vmem:[%s0 + $0x1c] sm:$0xf]
  %v23 = vld [vmem:[%s0 + $0x20] sm:$0xf]
  %v24 = vld [vmem:[%s0 + $0x24] sm:$0xf]
  %v25 = vld [vmem:[%s0 + $0x28] sm:$0xf]
  %v26 = vld [vmem:[%s0 + $0x2c] sm:$0xf]
  %v27 = vld [vmem:[%s0 + $0x30] sm:$0xf]
  %v28 = vld [vmem:[%s0 + $0x34] sm:$0xf]
  %v29 = vld [vmem:[%s0 + $0x38] sm:$0xf]
  %v30 = vld [vmem:[%s0 + $0x3c] sm:$0xf]
  %v31 = vld [vmem:[%s1] sm:$0x3]
  %v48 = vunpack.c.l.b16 %v15
  %v49 = vunpack.c.l.b16 %v16
  %v50 = vunpack.c.l.b16 %v17
  %v51 = vunpack.c.l.b16 %v18
  %v52 = vunpack.c.l.b16 %v19
  %v53 = vunpack.c.l.b16 %v20
  %v54 = vunpack.c.l.b16 %v21
  %v55 = vunpack.c.l.b16 %v22
  %v56 = vunpack.c.l.b16 %v23
  %v57 = vunpack.c.l.b16 %v24
  %v58 = vunpack.c.l.b16 %v25
  %v59 = vunpack.c.l.b16 %v26
  %v60 = vunpack.c.l.b16 %v27
  %v61 = vunpack.c.l.b16 %v28
  %v62 = vunpack.c.l.b16 %v29
  %v63 = vunpack.c.l.b16 %v30
  %v64 = vpack.c.b16 %v49, %v48
  %v65 = vpack.c.b16 %v51, %v50
  %v66 = vpack.c.b16 %v53, %v52
  %v67 = vpack.c.b16 %v55, %v54
  %v68 = vpack.c.b16 %v57, %v56
  %v69 = vpack.c.b16 %v59, %v58
  %v70 = vpack.c.b16 %v61, %v60
  %v71 = vpack.c.b16 %v63, %v62
  %vm72 = vcmask 31744
  %v74 = vsel %vm72, %v64, 0
  %v77 = vsel %vm72, %v65, 0
  %v80 = vsel %vm72, %v66, 0
  %v83 = vsel %vm72, %v67, 0
  %v86 = vsel %vm72, %v68, 0
  %v89 = vsel %vm72, %v69, 0
  %v92 = vsel %vm72, %v70, 0
  %v95 = vsel %vm72, %v71, 0
  %vm97 = vcmask 1041408
  %v99 = vsel %vm97, %v31, 0
  %101 = vmatprep.subr.bf16.mxu0 0
  %102 = vmatpush1.bf16.msra.mxu0 %v99
  %103 = vmatprep.subr.bf16.mxu0 0
  %104 = vmatpush1.bf16.msra.mxu0 0
  %105 = vmatprep.subr.bf16.mxu0 0
  %106 = vmatpush1.bf16.msra.mxu0 0
  %107 = vmatprep.subr.bf16.mxu0 0
  %108 = vmatpush1.bf16.msra.mxu0 0
  %109 = vmatprep.subr.bf16.mxu0 0
  %110 = vmatpush1.bf16.msra.mxu0 0
  %111 = vmatprep.subr.bf16.mxu0 0
  %112 = vmatpush1.bf16.msra.mxu0 0
  %113 = vmatprep.subr.bf16.mxu0 0
  %114 = vmatpush1.bf16.msra.mxu0 0
  %115 = vmatprep.subr.bf16.mxu0 0
  %116 = vmatpush1.bf16.msra.mxu0 0
  %117 = vmatprep.subr.bf16.mxu0 0
  %118 = vmatpush1.bf16.msra.mxu0 0
  %119 = vmatprep.subr.bf16.mxu0 0
  %120 = vmatpush1.bf16.msra.mxu0 0
  %121 = vmatprep.subr.bf16.mxu0 0
  %122 = vmatpush1.bf16.msra.mxu0 0
  %123 = vmatprep.subr.bf16.mxu0 0
  %124 = vmatpush1.bf16.msra.mxu0 0
  %125 = vmatprep.subr.bf16.mxu0 0
  %126 = vmatpush1.bf16.msra.mxu0 0
  %127 = vmatprep.subr.bf16.mxu0 0
  %128 = vmatpush1.bf16.msra.mxu0 0
  %129 = vmatprep.subr.bf16.mxu0 0
  %130 = vmatpush1.bf16.msra.mxu0 0
  %131 = vmatprep.subr.bf16.mxu0 0
  %132 = vmatpush1.bf16.msra.mxu0 0
  %133 = vmatprep.mubr.bf16.mxu0 0
  %134 = vmatmul.mubr.bf16.gmra.mrb[0].mxu0 %v74
  %v135 = vpop.f32.mrb[0].mxu0
  %v136 = vadd.f32 0.0, %v135
  %v137 = vpop.f32.mrb[0].mxu0
  %v138 = vpop.f32.mrb[0].mxu0
  %v139 = vadd.f32 0.0, %v138
  %v140 = vpop.f32.mrb[0].mxu0
  %141 = vmatprep.mubr.bf16.mxu0 0
  %142 = vmatmul.mubr.bf16.gmra.mrb[0].mxu0 %v77
  %v143 = vpop.f32.mrb[0].mxu0
  %v144 = vadd.f32 0.0, %v143
  %v145 = vpop.f32.mrb[0].mxu0
  %v146 = vpop.f32.mrb[0].mxu0
  %v147 = vadd.f32 0.0, %v146
  %v148 = vpop.f32.mrb[0].mxu0
  %149 = vmatprep.mubr.bf16.mxu0 0
  %150 = vmatmul.mubr.bf16.gmra.mrb[0].mxu0 %v80
  %v151 = vpop.f32.mrb[0].mxu0
  %v152 = vadd.f32 0.0, %v151
  %v153 = vpop.f32.mrb[0].mxu0
  %v154 = vpop.f32.mrb[0].mxu0
  %v155 = vadd.f32 0.0, %v154
  %v156 = vpop.f32.mrb[0].mxu0
  %157 = vmatprep.mubr.bf16.mxu0 0
  %158 = vmatmul.mubr.bf16.gmra.mrb[0].mxu0 %v83
  %v159 = vpop.f32.mrb[0].mxu0
  %v160 = vadd.f32 0.0, %v159
  %v161 = vpop.f32.mrb[0].mxu0
  %v162 = vpop.f32.mrb[0].mxu0
  %v163 = vadd.f32 0.0, %v162
  %v164 = vpop.f32.mrb[0].mxu0
  %165 = vmatprep.mubr.bf16.mxu0 0
  %166 = vmatmul.mubr.bf16.gmra.mrb[0].mxu0 %v86
  %v167 = vpop.f32.mrb[0].mxu0
  %v168 = vadd.f32 0.0, %v167
  %v169 = vpop.f32.mrb[0].mxu0
  %v170 = vpop.f32.mrb[0].mxu0
  %v171 = vadd.f32 0.0, %v170
  %v172 = vpop.f32.mrb[0].mxu0
  %173 = vmatprep.mubr.bf16.mxu0 0
  %174 = vmatmul.mubr.bf16.gmra.mrb[0].mxu0 %v89
  %v175 = vpop.f32.mrb[0].mxu0
  %v176 = vadd.f32 0.0, %v175
  %v177 = vpop.f32.mrb[0].mxu0
  %v178 = vpop.f32.mrb[0].mxu0
  %v179 = vadd.f32 0.0, %v178
  %v180 = vpop.f32.mrb[0].mxu0
  %181 = vmatprep.mubr.bf16.mxu0 0
  %182 = vmatmul.mubr.bf16.gmra.mrb[0].mxu0 %v92
  %v183 = vpop.f32.mrb[0].mxu0
  %v184 = vadd.f32 0.0, %v183
  %v185 = vpop.f32.mrb[0].mxu0
  %v186 = vpop.f32.mrb[0].mxu0
  %v187 = vadd.f32 0.0, %v186
  %v188 = vpop.f32.mrb[0].mxu0
  %189 = vmatprep.mubr.bf16.mxu0 0
  %190 = vmatmul.mubr.bf16.gmra.mrb[0].mxu0 %v95
  %v191 = vpop.f32.mrb[0].mxu0
  %v192 = vadd.f32 0.0, %v191
  %v193 = vpop.f32.mrb[0].mxu0
  %v194 = vpop.f32.mrb[0].mxu0
  %v195 = vadd.f32 0.0, %v194
  %v196 = vpop.f32.mrb[0].mxu0
  %197 = vdwg.mxu0
  %198 = vst [vmem:[%s2] sm:$0xff] %v136
  %199 = vst [vmem:[%s2 + $0x8] sm:$0xff] %v139
  %200 = vst [vmem:[%s2 + $0x10] sm:$0xff] %v144
  %201 = vst [vmem:[%s2 + $0x18] sm:$0xff] %v147
  %202 = vst [vmem:[%s2 + $0x20] sm:$0xff] %v152
  %203 = vst [vmem:[%s2 + $0x28] sm:$0xff] %v155
  %204 = vst [vmem:[%s2 + $0x30] sm:$0xff] %v160
  %205 = vst [vmem:[%s2 + $0x38] sm:$0xff] %v163
  %206 = vst [vmem:[%s2 + $0x40] sm:$0xff] %v168
  %207 = vst [vmem:[%s2 + $0x48] sm:$0xff] %v171
  %208 = vst [vmem:[%s2 + $0x50] sm:$0xff] %v176
  %209 = vst [vmem:[%s2 + $0x58] sm:$0xff] %v179
  %210 = vst [vmem:[%s2 + $0x60] sm:$0xff] %v184
  %211 = vst [vmem:[%s2 + $0x68] sm:$0xff] %v187
  %212 = vst [vmem:[%s2 + $0x70] sm:$0xff] %v192
  %213 = vst [vmem:[%s2 + $0x78] sm:$0xff] %v195
  %v214 = vadd.f32 %v136, %v139
  %v215 = vadd.f32 %v214, %v144
  %v216 = vadd.f32 %v215, %v147
  %v217 = vadd.f32 %v216, %v152
  %v218 = vadd.f32 %v217, %v155
  %v219 = vadd.f32 %v218, %v160
  %v220 = vadd.f32 %v219, %v163
  %v221 = vadd.f32 %v220, %v168
  %v222 = vadd.f32 %v221, %v171
  %v223 = vadd.f32 %v222, %v176
  %v224 = vadd.f32 %v223, %v179
  %v225 = vadd.f32 %v224, %v184
  %v226 = vadd.f32 %v225, %v187
  %v227 = vadd.f32 %v226, %v192
  %v228 = vadd.f32 %v227, %v195
  %229 = vst [vmem:[%s3] sm:$0xff] %v228
  %v230 = vmul.f32 %v136, %v136
  %v231 = vmul.f32 %v139, %v139
  %v232 = vmul.f32 %v144, %v144
  %v233 = vmul.f32 %v147, %v147
  %v234 = vmul.f32 %v152, %v152
  %v235 = vmul.f32 %v155, %v155
  %v236 = vmul.f32 %v160, %v160
  %v237 = vmul.f32 %v163, %v163
  %v238 = vmul.f32 %v168, %v168
  %v239 = vmul.f32 %v171, %v171
  %v240 = vmul.f32 %v176, %v176
  %v241 = vmul.f32 %v179, %v179
  %v242 = vmul.f32 %v184, %v184
  %v243 = vmul.f32 %v187, %v187
  %v244 = vmul.f32 %v192, %v192
  %v245 = vmul.f32 %v195, %v195
  %v246 = vadd.f32 %v230, %v231
  %v247 = vadd.f32 %v246, %v232
  %v248 = vadd.f32 %v247, %v233
  %v249 = vadd.f32 %v248, %v234
  %v250 = vadd.f32 %v249, %v235
  %v251 = vadd.f32 %v250, %v236
  %v252 = vadd.f32 %v251, %v237
  %v253 = vadd.f32 %v252, %v238
  %v254 = vadd.f32 %v253, %v239
  %v255 = vadd.f32 %v254, %v240
  %v256 = vadd.f32 %v255, %v241
  %v257 = vadd.f32 %v256, %v242
  %v258 = vadd.f32 %v257, %v243
  %v259 = vadd.f32 %v258, %v244
  %v260 = vadd.f32 %v259, %v245
  %261 = vst [vmem:[%s4] sm:$0xff] %v260
  // Predicated region
  $region10: #{resblock2_forward.5} parent=0 // pred_check
    _
  $region11: #{resblock2_forward.5} parent=0 // pred_check_branch
    %263 = sbr.rel (0) target = $region13
  $region12: #{resblock2_forward.5} parent=0 // pred_region
    _
  $region13: #{resblock2_forward.5} parent=0 // pred_fallthru
    _
  // Predicated region
  $region14: #{resblock2_forward.5} parent=0 // pred_check
    _
  $region15: #{resblock2_forward.5} parent=0 // pred_check_branch
    %265 = sbr.rel (0) target = $region17
  $region16: #{resblock2_forward.5} parent=0 // pred_region
    _
  $region17: #{resblock2_forward.5} parent=0 // pred_fallthru
    _
  // Predicated region
  $region18: #{resblock2_forward.5} parent=0 // pred_check
    _
  $region19: #{resblock2_forward.5} parent=0 // pred_check_branch
    %267 = sbr.rel (0) target = $region21
  $region20: #{resblock2_forward.5} parent=0 // pred_region
    _
  $region21: #{resblock2_forward.5} parent=0 // pred_fallthru
    _
  // Predicated region
  $region22: #{resblock2_forward.5} parent=0 // pred_check
    _
  $region23: #{resblock2_forward.5} parent=0 // pred_check_branch
    %269 = sbr.rel (0) target = $region25
  $region24: #{resblock2_forward.5} parent=0 // pred_region
    _
  $region25: #{resblock2_forward.5} parent=0 // pred_fallthru
    _
  // Predicated region
  $region26: #{resblock2_forward.5} parent=0 // pred_check
    _
  $region27: #{resblock2_forward.5} parent=0 // pred_check_branch
    %271 = sbr.rel (0) target = $region29
  $region28: #{resblock2_forward.5} parent=0 // pred_region
    _
  $region29: #{resblock2_forward.5} parent=0 // pred_fallthru
    _
  // Predicated region
  $region30: #{resblock2_forward.5} parent=0 // pred_check
    _
  $region31: #{resblock2_forward.5} parent=0 // pred_check_branch
    %273 = sbr.rel (0) target = $region33
  $region32: #{resblock2_forward.5} parent=0 // pred_region
    _
  $region33: #{resblock2_forward.5} parent=0 // pred_fallthru
    _

// kernel: resblock2_forward.6
$region0: #{resblock2_forward.6}
  #allocation0 [shape = 'u32[]', space=smem, size = 0x4, offset = 0x4, fixed_abs, tag = 'smem constant byte address 0x4 - core index']
  #allocation1 [shape = 'u32[144,128]{1,0:T(1,128)}', space=vmem, size = 0x12000, scoped, tag = 'internal scratch']
  %s0 = inlined_call_operand.vmem [shape: bf16[128,36], index: 0, kind: input, shape index: {}]
  %s1 = inlined_call_operand.vmem [shape: bf16[36,128], index: 1, kind: input, shape index: {}]
  %s2 = inlined_call_operand.vmem [shape: f32[128,128], index: 2, kind: output, shape index: {0}]
  %s3 = inlined_call_operand.vmem [shape: f32[8,128], index: 3, kind: output, shape index: {1}]
  %s4 = inlined_call_operand.vmem [shape: f32[8,128], index: 4, kind: output, shape index: {2}]
  %5 = xla_tuple %s2, %s3, %s4
  %s6 = sld [smem:[#allocation0]]
  $region34: #{resblock2_forward.6} parent=0
    _
  %s8 = ssub.s32 1, %s6
  %s9 = scalar_select 0, %s8, %s6
  // Predicated region
  $region2: #{resblock2_forward.6} parent=0 // pred_check
    _
  $region3: #{resblock2_forward.6} parent=0 // pred_check_branch
    %11 = sbr.rel (0) target = $region5
  $region4: #{resblock2_forward.6} parent=0 // pred_region
    _
  $region5: #{resblock2_forward.6} parent=0 // pred_fallthru
    _
  // Predicated region
  $region6: #{resblock2_forward.6} parent=0 // pred_check
    _
  $region7: #{resblock2_forward.6} parent=0 // pred_check_branch
    %13 = sbr.rel (0) target = $region9
  $region8: #{resblock2_forward.6} parent=0 // pred_region
    _
  $region9: #{resblock2_forward.6} parent=0 // pred_fallthru
    _
  %v15 = vld [vmem:[%s0] sm:$0xf]
  %v16 = vld [vmem:[%s0 + $0x4] sm:$0xf]
  %v17 = vld [vmem:[%s0 + $0x8] sm:$0xf]
  %v18 = vld [vmem:[%s0 + $0xc] sm:$0xf]
  %v19 = vld [vmem:[%s0 + $0x10] sm:$0xf]
  %v20 = vld [vmem:[%s0 + $0x14] sm:$0xf]
  %v21 = vld [vmem:[%s0 + $0x18] sm:$0xf]
  %v22 = vld [vmem:[%s0 + $0x1c] sm:$0xf]
  %v23 = vld [vmem:[%s0 + $0x20] sm:$0xf]
  %v24 = vld [vmem:[%s0 + $0x24] sm:$0xf]
  %v25 = vld [vmem:[%s0 + $0x28] sm:$0xf]
  %v26 = vld [vmem:[%s0 + $0x2c] sm:$0xf]
  %v27 = vld [vmem:[%s0 + $0x30] sm:$0xf]
  %v28 = vld [vmem:[%s0 + $0x34] sm:$0xf]
  %v29 = vld [vmem:[%s0 + $0x38] sm:$0xf]
  %v30 = vld [vmem:[%s0 + $0x3c] sm:$0xf]
  %v31 = vld [vmem:[%s1] sm:$0xf]
  %v32 = vld [vmem:[%s1 + $0x4] sm:$0xf]
  %v33 = vld [vmem:[%s1 + $0x8] sm:$0xf]
  %v34 = vld [vmem:[%s1 + $0xc] sm:$0xf]
  %v35 = vld [vmem:[%s1 + $0x10] sm:$0x3]
  %v52 = vunpack.c.l.b16 %v15
  %v53 = vunpack.c.l.b16 %v16
  %v54 = vunpack.c.l.b16 %v17
  %v55 = vunpack.c.l.b16 %v18
  %v56 = vunpack.c.l.b16 %v19
  %v57 = vunpack.c.l.b16 %v20
  %v58 = vunpack.c.l.b16 %v21
  %v59 = vunpack.c.l.b16 %v22
  %v60 = vunpack.c.l.b16 %v23
  %v61 = vunpack.c.l.b16 %v24
  %v62 = vunpack.c.l.b16 %v25
  %v63 = vunpack.c.l.b16 %v26
  %v64 = vunpack.c.l.b16 %v27
  %v65 = vunpack.c.l.b16 %v28
  %v66 = vunpack.c.l.b16 %v29
  %v67 = vunpack.c.l.b16 %v30
  %v68 = vpack.c.b16 %v53, %v52
  %v69 = vpack.c.b16 %v55, %v54
  %v70 = vpack.c.b16 %v57, %v56
  %v71 = vpack.c.b16 %v59, %v58
  %v72 = vpack.c.b16 %v61, %v60
  %v73 = vpack.c.b16 %v63, %v62
  %v74 = vpack.c.b16 %v65, %v64
  %v75 = vpack.c.b16 %v67, %v66
  %v81 = vunpack.c.l.b16 %v31
  %v82 = vunpack.c.l.b16 %v32
  %v83 = vunpack.c.l.b16 %v33
  %v84 = vunpack.c.l.b16 %v34
  %v85 = vunpack.c.l.b16 %v35
  %v86 = vpack.c.b16 %v82, %v81
  %v87 = vpack.c.b16 %v84, %v83
  %v88 = vpack.c.b16 %v85, %v85
  %vm91 = vcmask 293888
  %v93 = vsel %vm91, %v68, 0
  %v96 = vsel %vm91, %v69, 0
  %v99 = vsel %vm91, %v70, 0
  %v102 = vsel %vm91, %v71, 0
  %v105 = vsel %vm91, %v72, 0
  %v108 = vsel %vm91, %v73, 0
  %v111 = vsel %vm91, %v74, 0
  %v114 = vsel %vm91, %v75, 0
  %vm116 = vcmask 1041408
  %v118 = vsel %vm116, %v88, 0
  %120 = vmatprep.subr.bf16.mxu0 0
  %121 = vmatpush1.bf16.msra.mxu0 %v86
  %122 = vmatprep.subr.bf16.mxu0 0
  %123 = vmatpush1.bf16.msra.mxu0 %v87
  %124 = vmatprep.subr.bf16.mxu0 0
  %125 = vmatpush1.bf16.msra.mxu0 %v118
  %126 = vmatprep.subr.bf16.mxu0 0
  %127 = vmatpush1.bf16.msra.mxu0 0
  %128 = vmatprep.subr.bf16.mxu0 0
  %129 = vmatpush1.bf16.msra.mxu0 0
  %130 = vmatprep.subr.bf16.mxu0 0
  %131 = vmatpush1.bf16.msra.mxu0 0
  %132 = vmatprep.subr.bf16.mxu0 0
  %133 = vmatpush1.bf16.msra.mxu0 0
  %134 = vmatprep.subr.bf16.mxu0 0
  %135 = vmatpush1.bf16.msra.mxu0 0
  %136 = vmatprep.subr.bf16.mxu0 0
  %137 = vmatpush1.bf16.msra.mxu0 0
  %138 = vmatprep.subr.bf16.mxu0 0
  %139 = vmatpush1.bf16.msra.mxu0 0
  %140 = vmatprep.subr.bf16.mxu0 0
  %141 = vmatpush1.bf16.msra.mxu0 0
  %142 = vmatprep.subr.bf16.mxu0 0
  %143 = vmatpush1.bf16.msra.mxu0 0
  %144 = vmatprep.subr.bf16.mxu0 0
  %145 = vmatpush1.bf16.msra.mxu0 0
  %146 = vmatprep.subr.bf16.mxu0 0
  %147 = vmatpush1.bf16.msra.mxu0 0
  %148 = vmatprep.subr.bf16.mxu0 0
  %149 = vmatpush1.bf16.msra.mxu0 0
  %150 = vmatprep.subr.bf16.mxu0 0
  %151 = vmatpush1.bf16.msra.mxu0 0
  %152 = vmatprep.mubr.bf16.mxu0 0
  %153 = vmatmul.mubr.bf16.gmra.mrb[0].mxu0 %v93
  %v154 = vpop.f32.mrb[0].mxu0
  %v155 = vadd.f32 0.0, %v154
  %v156 = vpop.f32.mrb[0].mxu0
  %v157 = vpop.f32.mrb[0].mxu0
  %v158 = vadd.f32 0.0, %v157
  %v159 = vpop.f32.mrb[0].mxu0
  %160 = vmatprep.mubr.bf16.mxu0 0
  %161 = vmatmul.mubr.bf16.gmra.mrb[0].mxu0 %v96
  %v162 = vpop.f32.mrb[0].mxu0
  %v163 = vadd.f32 0.0, %v162
  %v164 = vpop.f32.mrb[0].mxu0
  %v165 = vpop.f32.mrb[0].mxu0
  %v166 = vadd.f32 0.0, %v165
  %v167 = vpop.f32.mrb[0].mxu0
  %168 = vmatprep.mubr.bf16.mxu0 0
  %169 = vmatmul.mubr.bf16.gmra.mrb[0].mxu0 %v99
  %v170 = vpop.f32.mrb[0].mxu0
  %v171 = vadd.f32 0.0, %v170
  %v172 = vpop.f32.mrb[0].mxu0
  %v173 = vpop.f32.mrb[0].mxu0
  %v174 = vadd.f32 0.0, %v173
  %v175 = vpop.f32.mrb[0].mxu0
  %176 = vmatprep.mubr.bf16.mxu0 0
  %177 = vmatmul.mubr.bf16.gmra.mrb[0].mxu0 %v102
  %v178 = vpop.f32.mrb[0].mxu0
  %v179 = vadd.f32 0.0, %v178
  %v180 = vpop.f32.mrb[0].mxu0
  %v181 = vpop.f32.mrb[0].mxu0
  %v182 = vadd.f32 0.0, %v181
  %v183 = vpop.f32.mrb[0].mxu0
  %184 = vmatprep.mubr.bf16.mxu0 0
  %185 = vmatmul.mubr.bf16.gmra.mrb[0].mxu0 %v105
  %v186 = vpop.f32.mrb[0].mxu0
  %v187 = vadd.f32 0.0, %v186
  %v188 = vpop.f32.mrb[0].mxu0
  %v189 = vpop.f32.mrb[0].mxu0
  %v190 = vadd.f32 0.0, %v189
  %v191 = vpop.f32.mrb[0].mxu0
  %192 = vmatprep.mubr.bf16.mxu0 0
  %193 = vmatmul.mubr.bf16.gmra.mrb[0].mxu0 %v108
  %v194 = vpop.f32.mrb[0].mxu0
  %v195 = vadd.f32 0.0, %v194
  %v196 = vpop.f32.mrb[0].mxu0
  %v197 = vpop.f32.mrb[0].mxu0
  %v198 = vadd.f32 0.0, %v197
  %v199 = vpop.f32.mrb[0].mxu0
  %200 = vmatprep.mubr.bf16.mxu0 0
  %201 = vmatmul.mubr.bf16.gmra.mrb[0].mxu0 %v111
  %v202 = vpop.f32.mrb[0].mxu0
  %v203 = vadd.f32 0.0, %v202
  %v204 = vpop.f32.mrb[0].mxu0
  %v205 = vpop.f32.mrb[0].mxu0
  %v206 = vadd.f32 0.0, %v205
  %v207 = vpop.f32.mrb[0].mxu0
  %208 = vmatprep.mubr.bf16.mxu0 0
  %209 = vmatmul.mubr.bf16.gmra.mrb[0].mxu0 %v114
  %v210 = vpop.f32.mrb[0].mxu0
  %v211 = vadd.f32 0.0, %v210
  %v212 = vpop.f32.mrb[0].mxu0
  %v213 = vpop.f32.mrb[0].mxu0
  %v214 = vadd.f32 0.0, %v213
  %v215 = vpop.f32.mrb[0].mxu0
  %216 = vdwg.mxu0
  %217 = vst [vmem:[%s2] sm:$0xff] %v155
  %218 = vst [vmem:[%s2 + $0x8] sm:$0xff] %v158
  %219 = vst [vmem:[%s2 + $0x10] sm:$0xff] %v163
  %220 = vst [vmem:[%s2 + $0x18] sm:$0xff] %v166
  %221 = vst [vmem:[%s2 + $0x20] sm:$0xff] %v171
  %222 = vst [vmem:[%s2 + $0x28] sm:$0xff] %v174
  %223 = vst [vmem:[%s2 + $0x30] sm:$0xff] %v179
  %224 = vst [vmem:[%s2 + $0x38] sm:$0xff] %v182
  %225 = vst [vmem:[%s2 + $0x40] sm:$0xff] %v187
  %226 = vst [vmem:[%s2 + $0x48] sm:$0xff] %v190
  %227 = vst [vmem:[%s2 + $0x50] sm:$0xff] %v195
  %228 = vst [vmem:[%s2 + $0x58] sm:$0xff] %v198
  %229 = vst [vmem:[%s2 + $0x60] sm:$0xff] %v203
  %230 = vst [vmem:[%s2 + $0x68] sm:$0xff] %v206
  %231 = vst [vmem:[%s2 + $0x70] sm:$0xff] %v211
  %232 = vst [vmem:[%s2 + $0x78] sm:$0xff] %v214
  %v233 = vadd.f32 %v155, %v158
  %v234 = vadd.f32 %v233, %v163
  %v235 = vadd.f32 %v234, %v166
  %v236 = vadd.f32 %v235, %v171
  %v237 = vadd.f32 %v236, %v174
  %v238 = vadd.f32 %v237, %v179
  %v239 = vadd.f32 %v238, %v182
  %v240 = vadd.f32 %v239, %v187
  %v241 = vadd.f32 %v240, %v190
  %v242 = vadd.f32 %v241, %v195
  %v243 = vadd.f32 %v242, %v198
  %v244 = vadd.f32 %v243, %v203
  %v245 = vadd.f32 %v244, %v206
  %v246 = vadd.f32 %v245, %v211
  %v247 = vadd.f32 %v246, %v214
  %248 = vst [vmem:[%s3] sm:$0xff] %v247
  %v249 = vmul.f32 %v155, %v155
  %v250 = vmul.f32 %v158, %v158
  %v251 = vmul.f32 %v163, %v163
  %v252 = vmul.f32 %v166, %v166
  %v253 = vmul.f32 %v171, %v171
  %v254 = vmul.f32 %v174, %v174
  %v255 = vmul.f32 %v179, %v179
  %v256 = vmul.f32 %v182, %v182
  %v257 = vmul.f32 %v187, %v187
  %v258 = vmul.f32 %v190, %v190
  %v259 = vmul.f32 %v195, %v195
  %v260 = vmul.f32 %v198, %v198
  %v261 = vmul.f32 %v203, %v203
  %v262 = vmul.f32 %v206, %v206
  %v263 = vmul.f32 %v211, %v211
  %v264 = vmul.f32 %v214, %v214
  %v265 = vadd.f32 %v249, %v250
  %v266 = vadd.f32 %v265, %v251
  %v267 = vadd.f32 %v266, %v252
  %v268 = vadd.f32 %v267, %v253
  %v269 = vadd.f32 %v268, %v254
  %v270 = vadd.f32 %v269, %v255
  %v271 = vadd.f32 %v270, %v256
  %v272 = vadd.f32 %v271, %v257
  %v273 = vadd.f32 %v272, %v258
  %v274 = vadd.f32 %v273, %v259
  %v275 = vadd.f32 %v274, %v260
  %v276 = vadd.f32 %v275, %v261
  %v277 = vadd.f32 %v276, %v262
  %v278 = vadd.f32 %v277, %v263
  %v279 = vadd.f32 %v278, %v264
  %280 = vst [vmem:[%s4] sm:$0xff] %v279
  // Predicated region
  $region10: #{resblock2_forward.6} parent=0 // pred_check
    _
  $region11: #{resblock2_forward.6} parent=0 // pred_check_branch
    %282 = sbr.rel (0) target = $region13
  $region12: #{resblock2_forward.6} parent=0 // pred_region
    _
  $region13: #{resblock2_forward.6} parent=0 // pred_fallthru
    _
  // Predicated region
  $region14: #{resblock2_forward.6} parent=0 // pred_check
    _
  $region15: #{resblock2_forward.6} parent=0 // pred_check_branch
    %284 = sbr.rel (0) target = $region17
  $region16: #{resblock2_forward.6} parent=0 // pred_region
    _
  $region17: #{resblock2_forward.6} parent=0 // pred_fallthru
    _
  // Predicated region
  $region18: #{resblock2_forward.6} parent=0 // pred_check
    _
  $region19: #{resblock2_forward.6} parent=0 // pred_check_branch
    %286 = sbr.rel (0) target = $region21
  $region20: #{resblock2_forward.6} parent=0 // pred_region
    _
  $region21: #{resblock2_forward.6} parent=0 // pred_fallthru
    _
  // Predicated region
  $region22: #{resblock2_forward.6} parent=0 // pred_check
    _
  $region23: #{resblock2_forward.6} parent=0 // pred_check_branch
    %288 = sbr.rel (0) target = $region25
  $region24: #{resblock2_forward.6} parent=0 // pred_region
    _
  $region25: #{resblock2_forward.6} parent=0 // pred_fallthru
    _
  // Predicated region
  $region26: #{resblock2_forward.6} parent=0 // pred_check
    _
  $region27: #{resblock2_forward.6} parent=0 // pred_check_branch
    %290 = sbr.rel (0) target = $region29
  $region28: #{resblock2_forward.6} parent=0 // pred_region
    _
  $region29: #{resblock2_forward.6} parent=0 // pred_fallthru
    _
  // Predicated region
  $region30: #{resblock2_forward.6} parent=0 // pred_check
    _
  $region31: #{resblock2_forward.6} parent=0 // pred_check_branch
    %292 = sbr.rel (0) target = $region33
  $region32: #{resblock2_forward.6} parent=0 // pred_region
    _
  $region33: #{resblock2_forward.6} parent=0 // pred_fallthru
    _

// kernel: resblock2_forward.7
$region0: #{resblock2_forward.7}
  #allocation0 [shape = 'u32[]', space=smem, size = 0x4, offset = 0x4, fixed_abs, tag = 'smem constant byte address 0x4 - core index']
  #allocation1 [shape = 'u32[144,128]{1,0:T(1,128)}', space=vmem, size = 0x12000, scoped, tag = 'internal scratch']
  %s0 = inlined_call_operand.vmem [shape: f32[128,128], index: 0, kind: input, shape index: {}]
  %s1 = inlined_call_operand.vmem [shape: f32[1,128], index: 1, kind: input, shape index: {}]
  %s2 = inlined_call_operand.vmem [shape: f32[1,128], index: 2, kind: input, shape index: {}]
  %s3 = inlined_call_operand.vmem [shape: bf16[128,128], index: 3, kind: output, shape index: {}]
  %s4 = sld [smem:[#allocation0]]
  $region22: #{resblock2_forward.7} parent=0
    _
  %s6 = ssub.s32 1, %s4
  %s7 = scalar_select 0, %s6, %s4
  // Predicated region
  $region2: #{resblock2_forward.7} parent=0 // pred_check
    _
  $region3: #{resblock2_forward.7} parent=0 // pred_check_branch
    %9 = sbr.rel (0) target = $region5
  $region4: #{resblock2_forward.7} parent=0 // pred_region
    _
  $region5: #{resblock2_forward.7} parent=0 // pred_fallthru
    _
  // Predicated region
  $region6: #{resblock2_forward.7} parent=0 // pred_check
    _
  $region7: #{resblock2_forward.7} parent=0 // pred_check_branch
    %11 = sbr.rel (0) target = $region9
  $region8: #{resblock2_forward.7} parent=0 // pred_region
    _
  $region9: #{resblock2_forward.7} parent=0 // pred_fallthru
    _
  // Predicated region
  $region10: #{resblock2_forward.7} parent=0 // pred_check
    _
  $region11: #{resblock2_forward.7} parent=0 // pred_check_branch
    %13 = sbr.rel (0) target = $region13
  $region12: #{resblock2_forward.7} parent=0 // pred_region
    _
  $region13: #{resblock2_forward.7} parent=0 // pred_fallthru
    _
  %v14 = vld [vmem:[%s0] sm:$0xff]
  %v15 = vld [vmem:[%s0 + $0x8] sm:$0xff]
  %v16 = vld [vmem:[%s0 + $0x10] sm:$0xff]
  %v17 = vld [vmem:[%s0 + $0x18] sm:$0xff]
  %v18 = vld [vmem:[%s0 + $0x20] sm:$0xff]
  %v19 = vld [vmem:[%s0 + $0x28] sm:$0xff]
  %v20 = vld [vmem:[%s0 + $0x30] sm:$0xff]
  %v21 = vld [vmem:[%s0 + $0x38] sm:$0xff]
  %v22 = vld [vmem:[%s0 + $0x40] sm:$0xff]
  %v23 = vld [vmem:[%s0 + $0x48] sm:$0xff]
  %v24 = vld [vmem:[%s0 + $0x50] sm:$0xff]
  %v25 = vld [vmem:[%s0 + $0x58] sm:$0xff]
  %v26 = vld [vmem:[%s0 + $0x60] sm:$0xff]
  %v27 = vld [vmem:[%s0 + $0x68] sm:$0xff]
  %v28 = vld [vmem:[%s0 + $0x70] sm:$0xff]
  %v29 = vld [vmem:[%s0 + $0x78] sm:$0xff]
  %v30 = vld [vmem:[%s1] sm:$0x1]
  %v32 = vlaneseq
  %v33 = vshrl.u32 %v32, 7
  %v34 = vsub.s32 0, %v33
  %v35 = vrot.slane %v30, %v34
  %v37 = vmul.f32 %v14, %v35
  %v38 = vmul.f32 %v15, %v35
  %v39 = vmul.f32 %v16, %v35
  %v40 = vmul.f32 %v17, %v35
  %v41 = vmul.f32 %v18, %v35
  %v42 = vmul.f32 %v19, %v35
  %v43 = vmul.f32 %v20, %v35
  %v44 = vmul.f32 %v21, %v35
  %v45 = vmul.f32 %v22, %v35
  %v46 = vmul.f32 %v23, %v35
  %v47 = vmul.f32 %v24, %v35
  %v48 = vmul.f32 %v25, %v35
  %v49 = vmul.f32 %v26, %v35
  %v50 = vmul.f32 %v27, %v35
  %v51 = vmul.f32 %v28, %v35
  %v52 = vmul.f32 %v29, %v35
  %v53 = vld [vmem:[%s2] sm:$0x1]
  %v55 = vlaneseq
  %v56 = vshrl.u32 %v55, 7
  %v57 = vsub.s32 0, %v56
  %v58 = vrot.slane %v53, %v57
  %v60 = vadd.f32 %v37, %v58
  %v61 = vadd.f32 %v38, %v58
  %v62 = vadd.f32 %v39, %v58
  %v63 = vadd.f32 %v40, %v58
  %v64 = vadd.f32 %v41, %v58
  %v65 = vadd.f32 %v42, %v58
  %v66 = vadd.f32 %v43, %v58
  %v67 = vadd.f32 %v44, %v58
  %v68 = vadd.f32 %v45, %v58
  %v69 = vadd.f32 %v46, %v58
  %v70 = vadd.f32 %v47, %v58
  %v71 = vadd.f32 %v48, %v58
  %v72 = vadd.f32 %v49, %v58
  %v73 = vadd.f32 %v50, %v58
  %v74 = vadd.f32 %v51, %v58
  %v75 = vadd.f32 %v52, %v58
  %v76 = vmax.f32 %v60, 0.0
  %v77 = vmax.f32 %v61, 0.0
  %v78 = vmax.f32 %v62, 0.0
  %v79 = vmax.f32 %v63, 0.0
  %v80 = vmax.f32 %v64, 0.0
  %v81 = vmax.f32 %v65, 0.0
  %v82 = vmax.f32 %v66, 0.0
  %v83 = vmax.f32 %v67, 0.0
  %v84 = vmax.f32 %v68, 0.0
  %v85 = vmax.f32 %v69, 0.0
  %v86 = vmax.f32 %v70, 0.0
  %v87 = vmax.f32 %v71, 0.0
  %v88 = vmax.f32 %v72, 0.0
  %v89 = vmax.f32 %v73, 0.0
  %v90 = vmax.f32 %v74, 0.0
  %v91 = vmax.f32 %v75, 0.0
  %v92 = vpack.c.bf16 %v77, %v76
  %v93 = vpack.c.bf16 %v79, %v78
  %v94 = vpack.c.bf16 %v81, %v80
  %v95 = vpack.c.bf16 %v83, %v82
  %v96 = vpack.c.bf16 %v85, %v84
  %v97 = vpack.c.bf16 %v87, %v86
  %v98 = vpack.c.bf16 %v89, %v88
  %v99 = vpack.c.bf16 %v91, %v90
  %v108 = vunpack.c.l.b16 %v92
  %v109 = vunpack.c.h.b16 %v92
  %v110 = vunpack.c.l.b16 %v93
  %v111 = vunpack.c.h.b16 %v93
  %v112 = vunpack.c.l.b16 %v94
  %v113 = vunpack.c.h.b16 %v94
  %v114 = vunpack.c.l.b16 %v95
  %v115 = vunpack.c.h.b16 %v95
  %v116 = vunpack.c.l.b16 %v96
  %v117 = vunpack.c.h.b16 %v96
  %v118 = vunpack.c.l.b16 %v97
  %v119 = vunpack.c.h.b16 %v97
  %v120 = vunpack.c.l.b16 %v98
  %v121 = vunpack.c.h.b16 %v98
  %v122 = vunpack.c.l.b16 %v99
  %v123 = vunpack.c.h.b16 %v99
  %v124 = vpack.c.b16 %v108, %v108
  %v125 = vpack.c.b16 %v109, %v109
  %v126 = vpack.c.b16 %v110, %v110
  %v127 = vpack.c.b16 %v111, %v111
  %v128 = vpack.c.b16 %v112, %v112
  %v129 = vpack.c.b16 %v113, %v113
  %v130 = vpack.c.b16 %v114, %v114
  %v131 = vpack.c.b16 %v115, %v115
  %v132 = vpack.c.b16 %v116, %v116
  %v133 = vpack.c.b16 %v117, %v117
  %v134 = vpack.c.b16 %v118, %v118
  %v135 = vpack.c.b16 %v119, %v119
  %v136 = vpack.c.b16 %v120, %v120
  %v137 = vpack.c.b16 %v121, %v121
  %v138 = vpack.c.b16 %v122, %v122
  %v139 = vpack.c.b16 %v123, %v123
  %156 = vst [vmem:[%s3] sm:$0xf] %v124
  %157 = vst [vmem:[%s3 + $0x4] sm:$0xf] %v125
  %158 = vst [vmem:[%s3 + $0x8] sm:$0xf] %v126
  %159 = vst [vmem:[%s3 + $0xc] sm:$0xf] %v127
  %160 = vst [vmem:[%s3 + $0x10] sm:$0xf] %v128
  %161 = vst [vmem:[%s3 + $0x14] sm:$0xf] %v129
  %162 = vst [vmem:[%s3 + $0x18] sm:$0xf] %v130
  %163 = vst [vmem:[%s3 + $0x1c] sm:$0xf] %v131
  %164 = vst [vmem:[%s3 + $0x20] sm:$0xf] %v132
  %165 = vst [vmem:[%s3 + $0x24] sm:$0xf] %v133
  %166 = vst [vmem:[%s3 + $0x28] sm:$0xf] %v134
  %167 = vst [vmem:[%s3 + $0x2c] sm:$0xf] %v135
  %168 = vst [vmem:[%s3 + $0x30] sm:$0xf] %v136
  %169 = vst [vmem:[%s3 + $0x34] sm:$0xf] %v137
  %170 = vst [vmem:[%s3 + $0x38] sm:$0xf] %v138
  %171 = vst [vmem:[%s3 + $0x3c] sm:$0xf] %v139
  // Predicated region
  $region14: #{resblock2_forward.7} parent=0 // pred_check
    _
  $region15: #{resblock2_forward.7} parent=0 // pred_check_branch
    %173 = sbr.rel (0) target = $region17
  $region16: #{resblock2_forward.7} parent=0 // pred_region
    _
  $region17: #{resblock2_forward.7} parent=0 // pred_fallthru
    _
  // Predicated region
  $region18: #{resblock2_forward.7} parent=0 // pred_check
    _
  $region19: #{resblock2_forward.7} parent=0 // pred_check_branch
    %175 = sbr.rel (0) target = $region21
  $region20: #{resblock2_forward.7} parent=0 // pred_region
    _
  $region21: #{resblock2_forward.7} parent=0 // pred_fallthru
    _

// kernel: resblock2_forward.9
$region0: #{resblock2_forward.9}
  #allocation0 [shape = 'u32[]', space=smem, size = 0x4, offset = 0x4, fixed_abs, tag = 'smem constant byte address 0x4 - core index']
  #allocation1 [shape = 'u32[144,128]{1,0:T(1,128)}', space=vmem, size = 0x12000, scoped, tag = 'internal scratch']
  %s0 = inlined_call_operand.vmem [shape: f32[128,128], index: 0, kind: input, shape index: {}]
  %s1 = inlined_call_operand.vmem [shape: f32[1,128], index: 1, kind: input, shape index: {}]
  %s2 = inlined_call_operand.vmem [shape: f32[1,128], index: 2, kind: input, shape index: {}]
  %s3 = inlined_call_operand.vmem [shape: f32[128,128], index: 3, kind: input, shape index: {}]
  %s4 = inlined_call_operand.vmem [shape: f32[1,128], index: 4, kind: input, shape index: {}]
  %s5 = inlined_call_operand.vmem [shape: f32[1,128], index: 5, kind: input, shape index: {}]
  %s6 = inlined_call_operand.vmem [shape: f32[128,128], index: 6, kind: output, shape index: {}]
  %s7 = sld [smem:[#allocation0]]
  $region34: #{resblock2_forward.9} parent=0
    _
  %s9 = ssub.s32 1, %s7
  %s10 = scalar_select 0, %s9, %s7
  // Predicated region
  $region2: #{resblock2_forward.9} parent=0 // pred_check
    _
  $region3: #{resblock2_forward.9} parent=0 // pred_check_branch
    %12 = sbr.rel (0) target = $region5
  $region4: #{resblock2_forward.9} parent=0 // pred_region
    _
  $region5: #{resblock2_forward.9} parent=0 // pred_fallthru
    _
  // Predicated region
  $region6: #{resblock2_forward.9} parent=0 // pred_check
    _
  $region7: #{resblock2_forward.9} parent=0 // pred_check_branch
    %14 = sbr.rel (0) target = $region9
  $region8: #{resblock2_forward.9} parent=0 // pred_region
    _
  $region9: #{resblock2_forward.9} parent=0 // pred_fallthru
    _
  // Predicated region
  $region10: #{resblock2_forward.9} parent=0 // pred_check
    _
  $region11: #{resblock2_forward.9} parent=0 // pred_check_branch
    %16 = sbr.rel (0) target = $region13
  $region12: #{resblock2_forward.9} parent=0 // pred_region
    _
  $region13: #{resblock2_forward.9} parent=0 // pred_fallthru
    _
  // Predicated region
  $region14: #{resblock2_forward.9} parent=0 // pred_check
    _
  $region15: #{resblock2_forward.9} parent=0 // pred_check_branch
    %18 = sbr.rel (0) target = $region17
  $region16: #{resblock2_forward.9} parent=0 // pred_region
    _
  $region17: #{resblock2_forward.9} parent=0 // pred_fallthru
    _
  // Predicated region
  $region18: #{resblock2_forward.9} parent=0 // pred_check
    _
  $region19: #{resblock2_forward.9} parent=0 // pred_check_branch
    %20 = sbr.rel (0) target = $region21
  $region20: #{resblock2_forward.9} parent=0 // pred_region
    _
  $region21: #{resblock2_forward.9} parent=0 // pred_fallthru
    _
  // Predicated region
  $region22: #{resblock2_forward.9} parent=0 // pred_check
    _
  $region23: #{resblock2_forward.9} parent=0 // pred_check_branch
    %22 = sbr.rel (0) target = $region25
  $region24: #{resblock2_forward.9} parent=0 // pred_region
    _
  $region25: #{resblock2_forward.9} parent=0 // pred_fallthru
    _
  %v23 = vld [vmem:[%s0] sm:$0xff]
  %v24 = vld [vmem:[%s0 + $0x8] sm:$0xff]
  %v25 = vld [vmem:[%s0 + $0x10] sm:$0xff]
  %v26 = vld [vmem:[%s0 + $0x18] sm:$0xff]
  %v27 = vld [vmem:[%s0 + $0x20] sm:$0xff]
  %v28 = vld [vmem:[%s0 + $0x28] sm:$0xff]
  %v29 = vld [vmem:[%s0 + $0x30] sm:$0xff]
  %v30 = vld [vmem:[%s0 + $0x38] sm:$0xff]
  %v31 = vld [vmem:[%s0 + $0x40] sm:$0xff]
  %v32 = vld [vmem:[%s0 + $0x48] sm:$0xff]
  %v33 = vld [vmem:[%s0 + $0x50] sm:$0xff]
  %v34 = vld [vmem:[%s0 + $0x58] sm:$0xff]
  %v35 = vld [vmem:[%s0 + $0x60] sm:$0xff]
  %v36 = vld [vmem:[%s0 + $0x68] sm:$0xff]
  %v37 = vld [vmem:[%s0 + $0x70] sm:$0xff]
  %v38 = vld [vmem:[%s0 + $0x78] sm:$0xff]
  %v39 = vld [vmem:[%s1] sm:$0x1]
  %v41 = vlaneseq
  %v42 = vshrl.u32 %v41, 7
  %v43 = vsub.s32 0, %v42
  %v44 = vrot.slane %v39, %v43
  %v46 = vmul.f32 %v23, %v44
  %v47 = vmul.f32 %v24, %v44
  %v48 = vmul.f32 %v25, %v44
  %v49 = vmul.f32 %v26, %v44
  %v50 = vmul.f32 %v27, %v44
  %v51 = vmul.f32 %v28, %v44
  %v52 = vmul.f32 %v29, %v44
  %v53 = vmul.f32 %v30, %v44
  %v54 = vmul.f32 %v31, %v44
  %v55 = vmul.f32 %v32, %v44
  %v56 = vmul.f32 %v33, %v44
  %v57 = vmul.f32 %v34, %v44
  %v58 = vmul.f32 %v35, %v44
  %v59 = vmul.f32 %v36, %v44
  %v60 = vmul.f32 %v37, %v44
  %v61 = vmul.f32 %v38, %v44
  %v62 = vld [vmem:[%s2] sm:$0x1]
  %v64 = vlaneseq
  %v65 = vshrl.u32 %v64, 7
  %v66 = vsub.s32 0, %v65
  %v67 = vrot.slane %v62, %v66
  %v69 = vadd.f32 %v46, %v67
  %v70 = vadd.f32 %v47, %v67
  %v71 = vadd.f32 %v48, %v67
  %v72 = vadd.f32 %v49, %v67
  %v73 = vadd.f32 %v50, %v67
  %v74 = vadd.f32 %v51, %v67
  %v75 = vadd.f32 %v52, %v67
  %v76 = vadd.f32 %v53, %v67
  %v77 = vadd.f32 %v54, %v67
  %v78 = vadd.f32 %v55, %v67
  %v79 = vadd.f32 %v56, %v67
  %v80 = vadd.f32 %v57, %v67
  %v81 = vadd.f32 %v58, %v67
  %v82 = vadd.f32 %v59, %v67
  %v83 = vadd.f32 %v60, %v67
  %v84 = vadd.f32 %v61, %v67
  %v85 = vld [vmem:[%s3] sm:$0xff]
  %v86 = vld [vmem:[%s3 + $0x8] sm:$0xff]
  %v87 = vld [vmem:[%s3 + $0x10] sm:$0xff]
  %v88 = vld [vmem:[%s3 + $0x18] sm:$0xff]
  %v89 = vld [vmem:[%s3 + $0x20] sm:$0xff]
  %v90 = vld [vmem:[%s3 + $0x28] sm:$0xff]
  %v91 = vld [vmem:[%s3 + $0x30] sm:$0xff]
  %v92 = vld [vmem:[%s3 + $0x38] sm:$0xff]
  %v93 = vld [vmem:[%s3 + $0x40] sm:$0xff]
  %v94 = vld [vmem:[%s3 + $0x48] sm:$0xff]
  %v95 = vld [vmem:[%s3 + $0x50] sm:$0xff]
  %v96 = vld [vmem:[%s3 + $0x58] sm:$0xff]
  %v97 = vld [vmem:[%s3 + $0x60] sm:$0xff]
  %v98 = vld [vmem:[%s3 + $0x68] sm:$0xff]
  %v99 = vld [vmem:[%s3 + $0x70] sm:$0xff]
  %v100 = vld [vmem:[%s3 + $0x78] sm:$0xff]
  %v101 = vld [vmem:[%s4] sm:$0x1]
  %v103 = vlaneseq
  %v104 = vshrl.u32 %v103, 7
  %v105 = vsub.s32 0, %v104
  %v106 = vrot.slane %v101, %v105
  %v108 = vmul.f32 %v85, %v106
  %v109 = vmul.f32 %v86, %v106
  %v110 = vmul.f32 %v87, %v106
  %v111 = vmul.f32 %v88, %v106
  %v112 = vmul.f32 %v89, %v106
  %v113 = vmul.f32 %v90, %v106
  %v114 = vmul.f32 %v91, %v106
  %v115 = vmul.f32 %v92, %v106
  %v116 = vmul.f32 %v93, %v106
  %v117 = vmul.f32 %v94, %v106
  %v118 = vmul.f32 %v95, %v106
  %v119 = vmul.f32 %v96, %v106
  %v120 = vmul.f32 %v97, %v106
  %v121 = vmul.f32 %v98, %v106
  %v122 = vmul.f32 %v99, %v106
  %v123 = vmul.f32 %v100, %v106
  %v124 = vld [vmem:[%s5] sm:$0x1]
  %v126 = vlaneseq
  %v127 = vshrl.u32 %v126, 7
  %v128 = vsub.s32 0, %v127
  %v129 = vrot.slane %v124, %v128
  %v131 = vadd.f32 %v108, %v129
  %v132 = vadd.f32 %v109, %v129
  %v133 = vadd.f32 %v110, %v129
  %v134 = vadd.f32 %v111, %v129
  %v135 = vadd.f32 %v112, %v129
  %v136 = vadd.f32 %v113, %v129
  %v137 = vadd.f32 %v114, %v129
  %v138 = vadd.f32 %v115, %v129
  %v139 = vadd.f32 %v116, %v129
  %v140 = vadd.f32 %v117, %v129
  %v141 = vadd.f32 %v118, %v129
  %v142 = vadd.f32 %v119, %v129
  %v143 = vadd.f32 %v120, %v129
  %v144 = vadd.f32 %v121, %v129
  %v145 = vadd.f32 %v122, %v129
  %v146 = vadd.f32 %v123, %v129
  %v147 = vadd.f32 %v69, %v131
  %v148 = vadd.f32 %v70, %v132
  %v149 = vadd.f32 %v71, %v133
  %v150 = vadd.f32 %v72, %v134
  %v151 = vadd.f32 %v73, %v135
  %v152 = vadd.f32 %v74, %v136
  %v153 = vadd.f32 %v75, %v137
  %v154 = vadd.f32 %v76, %v138
  %v155 = vadd.f32 %v77, %v139
  %v156 = vadd.f32 %v78, %v140
  %v157 = vadd.f32 %v79, %v141
  %v158 = vadd.f32 %v80, %v142
  %v159 = vadd.f32 %v81, %v143
  %v160 = vadd.f32 %v82, %v144
  %v161 = vadd.f32 %v83, %v145
  %v162 = vadd.f32 %v84, %v146
  %v163 = vmax.f32 %v147, 0.0
  %v164 = vmax.f32 %v148, 0.0
  %v165 = vmax.f32 %v149, 0.0
  %v166 = vmax.f32 %v150, 0.0
  %v167 = vmax.f32 %v151, 0.0
  %v168 = vmax.f32 %v152, 0.0
  %v169 = vmax.f32 %v153, 0.0
  %v170 = vmax.f32 %v154, 0.0
  %v171 = vmax.f32 %v155, 0.0
  %v172 = vmax.f32 %v156, 0.0
  %v173 = vmax.f32 %v157, 0.0
  %v174 = vmax.f32 %v158, 0.0
  %v175 = vmax.f32 %v159, 0.0
  %v176 = vmax.f32 %v160, 0.0
  %v177 = vmax.f32 %v161, 0.0
  %v178 = vmax.f32 %v162, 0.0
  %179 = vst [vmem:[%s6] sm:$0xff] %v163
  %180 = vst [vmem:[%s6 + $0x8] sm:$0xff] %v164
  %181 = vst [vmem:[%s6 + $0x10] sm:$0xff] %v165
  %182 = vst [vmem:[%s6 + $0x18] sm:$0xff] %v166
  %183 = vst [vmem:[%s6 + $0x20] sm:$0xff] %v167
  %184 = vst [vmem:[%s6 + $0x28] sm:$0xff] %v168
  %185 = vst [vmem:[%s6 + $0x30] sm:$0xff] %v169
  %186 = vst [vmem:[%s6 + $0x38] sm:$0xff] %v170
  %187 = vst [vmem:[%s6 + $0x40] sm:$0xff] %v171
  %188 = vst [vmem:[%s6 + $0x48] sm:$0xff] %v172
  %189 = vst [vmem:[%s6 + $0x50] sm:$0xff] %v173
  %190 = vst [vmem:[%s6 + $0x58] sm:$0xff] %v174
  %191 = vst [vmem:[%s6 + $0x60] sm:$0xff] %v175
  %192 = vst [vmem:[%s6 + $0x68] sm:$0xff] %v176
  %193 = vst [vmem:[%s6 + $0x70] sm:$0xff] %v177
  %194 = vst [vmem:[%s6 + $0x78] sm:$0xff] %v178
  // Predicated region
  $region26: #{resblock2_forward.9} parent=0 // pred_check
    _
  $region27: #{resblock2_forward.9} parent=0 // pred_check_branch
    %196 = sbr.rel (0) target = $region29
  $region28: #{resblock2_forward.9} parent=0 // pred_region
    _
  $region29: #{resblock2_forward.9} parent=0 // pred_fallthru
    _
  // Predicated region
  $region30: #{resblock2_forward.9} parent=0 // pred_check
    _
  $region31: #{resblock2_forward.9} parent=0 // pred_check_branch
    %198 = sbr.rel (0) target = $region33
  $region32: #{resblock2_forward.9} parent=0 // pred_region
    _
  $region33: #{resblock2_forward.9} parent=0 // pred_fallthru
    _

// kernel: resblock2_forward.8
$region0: #{resblock2_forward.8}
  #allocation0 [shape = 'u32[]', space=smem, size = 0x4, offset = 0x4, fixed_abs, tag = 'smem constant byte address 0x4 - core index']
  #allocation1 [shape = 'u32[144,128]{1,0:T(1,128)}', space=vmem, size = 0x12000, scoped, tag = 'internal scratch']
  %s0 = inlined_call_operand.vmem [shape: bf16[128,72], index: 0, kind: input, shape index: {}]
  %s1 = inlined_call_operand.vmem [shape: bf16[72,128], index: 1, kind: input, shape index: {}]
  %s2 = inlined_call_operand.vmem [shape: f32[128,128], index: 2, kind: output, shape index: {0}]
  %s3 = inlined_call_operand.vmem [shape: f32[8,128], index: 3, kind: output, shape index: {1}]
  %s4 = inlined_call_operand.vmem [shape: f32[8,128], index: 4, kind: output, shape index: {2}]
  %5 = xla_tuple %s2, %s3, %s4
  %s6 = sld [smem:[#allocation0]]
  $region34: #{resblock2_forward.8} parent=0
    _
  %s8 = ssub.s32 1, %s6
  %s9 = scalar_select 0, %s8, %s6
  // Predicated region
  $region2: #{resblock2_forward.8} parent=0 // pred_check
    _
  $region3: #{resblock2_forward.8} parent=0 // pred_check_branch
    %11 = sbr.rel (0) target = $region5
  $region4: #{resblock2_forward.8} parent=0 // pred_region
    _
  $region5: #{resblock2_forward.8} parent=0 // pred_fallthru
    _
  // Predicated region
  $region6: #{resblock2_forward.8} parent=0 // pred_check
    _
  $region7: #{resblock2_forward.8} parent=0 // pred_check_branch
    %13 = sbr.rel (0) target = $region9
  $region8: #{resblock2_forward.8} parent=0 // pred_region
    _
  $region9: #{resblock2_forward.8} parent=0 // pred_fallthru
    _
  %v15 = vld [vmem:[%s0] sm:$0xf]
  %v16 = vld [vmem:[%s0 + $0x4] sm:$0xf]
  %v17 = vld [vmem:[%s0 + $0x8] sm:$0xf]
  %v18 = vld [vmem:[%s0 + $0xc] sm:$0xf]
  %v19 = vld [vmem:[%s0 + $0x10] sm:$0xf]
  %v20 = vld [vmem:[%s0 + $0x14] sm:$0xf]
  %v21 = vld [vmem:[%s0 + $0x18] sm:$0xf]
  %v22 = vld [vmem:[%s0 + $0x1c] sm:$0xf]
  %v23 = vld [vmem:[%s0 + $0x20] sm:$0xf]
  %v24 = vld [vmem:[%s0 + $0x24] sm:$0xf]
  %v25 = vld [vmem:[%s0 + $0x28] sm:$0xf]
  %v26 = vld [vmem:[%s0 + $0x2c] sm:$0xf]
  %v27 = vld [vmem:[%s0 + $0x30] sm:$0xf]
  %v28 = vld [vmem:[%s0 + $0x34] sm:$0xf]
  %v29 = vld [vmem:[%s0 + $0x38] sm:$0xf]
  %v30 = vld [vmem:[%s0 + $0x3c] sm:$0xf]
  %v31 = vld [vmem:[%s1] sm:$0xf]
  %v32 = vld [vmem:[%s1 + $0x4] sm:$0xf]
  %v33 = vld [vmem:[%s1 + $0x8] sm:$0xf]
  %v34 = vld [vmem:[%s1 + $0xc] sm:$0xf]
  %v35 = vld [vmem:[%s1 + $0x10] sm:$0xf]
  %v36 = vld [vmem:[%s1 + $0x14] sm:$0xf]
  %v37 = vld [vmem:[%s1 + $0x18] sm:$0xf]
  %v38 = vld [vmem:[%s1 + $0x1c] sm:$0xf]
  %v39 = vld [vmem:[%s1 + $0x20] sm:$0xf]
  %v56 = vunpack.c.l.b16 %v15
  %v57 = vunpack.c.l.b16 %v16
  %v58 = vunpack.c.l.b16 %v17
  %v59 = vunpack.c.l.b16 %v18
  %v60 = vunpack.c.l.b16 %v19
  %v61 = vunpack.c.l.b16 %v20
  %v62 = vunpack.c.l.b16 %v21
  %v63 = vunpack.c.l.b16 %v22
  %v64 = vunpack.c.l.b16 %v23
  %v65 = vunpack.c.l.b16 %v24
  %v66 = vunpack.c.l.b16 %v25
  %v67 = vunpack.c.l.b16 %v26
  %v68 = vunpack.c.l.b16 %v27
  %v69 = vunpack.c.l.b16 %v28
  %v70 = vunpack.c.l.b16 %v29
  %v71 = vunpack.c.l.b16 %v30
  %v72 = vpack.c.b16 %v57, %v56
  %v73 = vpack.c.b16 %v59, %v58
  %v74 = vpack.c.b16 %v61, %v60
  %v75 = vpack.c.b16 %v63, %v62
  %v76 = vpack.c.b16 %v65, %v64
  %v77 = vpack.c.b16 %v67, %v66
  %v78 = vpack.c.b16 %v69, %v68
  %v79 = vpack.c.b16 %v71, %v70
  %v89 = vunpack.c.l.b16 %v31
  %v90 = vunpack.c.l.b16 %v32
  %v91 = vunpack.c.l.b16 %v33
  %v92 = vunpack.c.l.b16 %v34
  %v93 = vunpack.c.l.b16 %v35
  %v94 = vunpack.c.l.b16 %v36
  %v95 = vunpack.c.l.b16 %v37
  %v96 = vunpack.c.l.b16 %v38
  %v97 = vunpack.c.l.b16 %v39
  %v98 = vpack.c.b16 %v90, %v89
  %v99 = vpack.c.b16 %v92, %v91
  %v100 = vpack.c.b16 %v94, %v93
  %v101 = vpack.c.b16 %v96, %v95
  %v102 = vpack.c.b16 %v97, %v97
  %vm107 = vcmask 588800
  %v109 = vsel %vm107, %v72, 0
  %v112 = vsel %vm107, %v73, 0
  %v115 = vsel %vm107, %v74, 0
  %v118 = vsel %vm107, %v75, 0
  %v121 = vsel %vm107, %v76, 0
  %v124 = vsel %vm107, %v77, 0
  %v127 = vsel %vm107, %v78, 0
  %v130 = vsel %vm107, %v79, 0
  %vm132 = vcmask 1043456
  %v134 = vsel %vm132, %v102, 0
  %136 = vmatprep.subr.bf16.mxu0 0
  %137 = vmatpush1.bf16.msra.mxu0 %v98
  %138 = vmatprep.subr.bf16.mxu0 0
  %139 = vmatpush1.bf16.msra.mxu0 %v99
  %140 = vmatprep.subr.bf16.mxu0 0
  %141 = vmatpush1.bf16.msra.mxu0 %v100
  %142 = vmatprep.subr.bf16.mxu0 0
  %143 = vmatpush1.bf16.msra.mxu0 %v101
  %144 = vmatprep.subr.bf16.mxu0 0
  %145 = vmatpush1.bf16.msra.mxu0 %v134
  %146 = vmatprep.subr.bf16.mxu0 0
  %147 = vmatpush1.bf16.msra.mxu0 0
  %148 = vmatprep.subr.bf16.mxu0 0
  %149 = vmatpush1.bf16.msra.mxu0 0
  %150 = vmatprep.subr.bf16.mxu0 0
  %151 = vmatpush1.bf16.msra.mxu0 0
  %152 = vmatprep.subr.bf16.mxu0 0
  %153 = vmatpush1.bf16.msra.mxu0 0
  %154 = vmatprep.subr.bf16.mxu0 0
  %155 = vmatpush1.bf16.msra.mxu0 0
  %156 = vmatprep.subr.bf16.mxu0 0
  %157 = vmatpush1.bf16.msra.mxu0 0
  %158 = vmatprep.subr.bf16.mxu0 0
  %159 = vmatpush1.bf16.msra.mxu0 0
  %160 = vmatprep.subr.bf16.mxu0 0
  %161 = vmatpush1.bf16.msra.mxu0 0
  %162 = vmatprep.subr.bf16.mxu0 0
  %163 = vmatpush1.bf16.msra.mxu0 0
  %164 = vmatprep.subr.bf16.mxu0 0
  %165 = vmatpush1.bf16.msra.mxu0 0
  %166 = vmatprep.subr.bf16.mxu0 0
  %167 = vmatpush1.bf16.msra.mxu0 0
  %168 = vmatprep.mubr.bf16.mxu0 0
  %169 = vmatmul.mubr.bf16.gmra.mrb[0].mxu0 %v109
  %v170 = vpop.f32.mrb[0].mxu0
  %v171 = vadd.f32 0.0, %v170
  %v172 = vpop.f32.mrb[0].mxu0
  %v173 = vpop.f32.mrb[0].mxu0
  %v174 = vadd.f32 0.0, %v173
  %v175 = vpop.f32.mrb[0].mxu0
  %176 = vmatprep.mubr.bf16.mxu0 0
  %177 = vmatmul.mubr.bf16.gmra.mrb[0].mxu0 %v112
  %v178 = vpop.f32.mrb[0].mxu0
  %v179 = vadd.f32 0.0, %v178
  %v180 = vpop.f32.mrb[0].mxu0
  %v181 = vpop.f32.mrb[0].mxu0
  %v182 = vadd.f32 0.0, %v181
  %v183 = vpop.f32.mrb[0].mxu0
  %184 = vmatprep.mubr.bf16.mxu0 0
  %185 = vmatmul.mubr.bf16.gmra.mrb[0].mxu0 %v115
  %v186 = vpop.f32.mrb[0].mxu0
  %v187 = vadd.f32 0.0, %v186
  %v188 = vpop.f32.mrb[0].mxu0
  %v189 = vpop.f32.mrb[0].mxu0
  %v190 = vadd.f32 0.0, %v189
  %v191 = vpop.f32.mrb[0].mxu0
  %192 = vmatprep.mubr.bf16.mxu0 0
  %193 = vmatmul.mubr.bf16.gmra.mrb[0].mxu0 %v118
  %v194 = vpop.f32.mrb[0].mxu0
  %v195 = vadd.f32 0.0, %v194
  %v196 = vpop.f32.mrb[0].mxu0
  %v197 = vpop.f32.mrb[0].mxu0
  %v198 = vadd.f32 0.0, %v197
  %v199 = vpop.f32.mrb[0].mxu0
  %200 = vmatprep.mubr.bf16.mxu0 0
  %201 = vmatmul.mubr.bf16.gmra.mrb[0].mxu0 %v121
  %v202 = vpop.f32.mrb[0].mxu0
  %v203 = vadd.f32 0.0, %v202
  %v204 = vpop.f32.mrb[0].mxu0
  %v205 = vpop.f32.mrb[0].mxu0
  %v206 = vadd.f32 0.0, %v205
  %v207 = vpop.f32.mrb[0].mxu0
  %208 = vmatprep.mubr.bf16.mxu0 0
  %209 = vmatmul.mubr.bf16.gmra.mrb[0].mxu0 %v124
  %v210 = vpop.f32.mrb[0].mxu0
  %v211 = vadd.f32 0.0, %v210
  %v212 = vpop.f32.mrb[0].mxu0
  %v213 = vpop.f32.mrb[0].mxu0
  %v214 = vadd.f32 0.0, %v213
  %v215 = vpop.f32.mrb[0].mxu0
  %216 = vmatprep.mubr.bf16.mxu0 0
  %217 = vmatmul.mubr.bf16.gmra.mrb[0].mxu0 %v127
  %v218 = vpop.f32.mrb[0].mxu0
  %v219 = vadd.f32 0.0, %v218
  %v220 = vpop.f32.mrb[0].mxu0
  %v221 = vpop.f32.mrb[0].mxu0
  %v222 = vadd.f32 0.0, %v221
  %v223 = vpop.f32.mrb[0].mxu0
  %224 = vmatprep.mubr.bf16.mxu0 0
  %225 = vmatmul.mubr.bf16.gmra.mrb[0].mxu0 %v130
  %v226 = vpop.f32.mrb[0].mxu0
  %v227 = vadd.f32 0.0, %v226
  %v228 = vpop.f32.mrb[0].mxu0
  %v229 = vpop.f32.mrb[0].mxu0
  %v230 = vadd.f32 0.0, %v229
  %v231 = vpop.f32.mrb[0].mxu0
  %232 = vdwg.mxu0
  %233 = vst [vmem:[%s2] sm:$0xff] %v171
  %234 = vst [vmem:[%s2 + $0x8] sm:$0xff] %v174
  %235 = vst [vmem:[%s2 + $0x10] sm:$0xff] %v179
  %236 = vst [vmem:[%s2 + $0x18] sm:$0xff] %v182
  %237 = vst [vmem:[%s2 + $0x20] sm:$0xff] %v187
  %238 = vst [vmem:[%s2 + $0x28] sm:$0xff] %v190
  %239 = vst [vmem:[%s2 + $0x30] sm:$0xff] %v195
  %240 = vst [vmem:[%s2 + $0x38] sm:$0xff] %v198
  %241 = vst [vmem:[%s2 + $0x40] sm:$0xff] %v203
  %242 = vst [vmem:[%s2 + $0x48] sm:$0xff] %v206
  %243 = vst [vmem:[%s2 + $0x50] sm:$0xff] %v211
  %244 = vst [vmem:[%s2 + $0x58] sm:$0xff] %v214
  %245 = vst [vmem:[%s2 + $0x60] sm:$0xff] %v219
  %246 = vst [vmem:[%s2 + $0x68] sm:$0xff] %v222
  %247 = vst [vmem:[%s2 + $0x70] sm:$0xff] %v227
  %248 = vst [vmem:[%s2 + $0x78] sm:$0xff] %v230
  %v249 = vadd.f32 %v171, %v174
  %v250 = vadd.f32 %v249, %v179
  %v251 = vadd.f32 %v250, %v182
  %v252 = vadd.f32 %v251, %v187
  %v253 = vadd.f32 %v252, %v190
  %v254 = vadd.f32 %v253, %v195
  %v255 = vadd.f32 %v254, %v198
  %v256 = vadd.f32 %v255, %v203
  %v257 = vadd.f32 %v256, %v206
  %v258 = vadd.f32 %v257, %v211
  %v259 = vadd.f32 %v258, %v214
  %v260 = vadd.f32 %v259, %v219
  %v261 = vadd.f32 %v260, %v222
  %v262 = vadd.f32 %v261, %v227
  %v263 = vadd.f32 %v262, %v230
  %264 = vst [vmem:[%s3] sm:$0xff] %v263
  %v265 = vmul.f32 %v171, %v171
  %v266 = vmul.f32 %v174, %v174
  %v267 = vmul.f32 %v179, %v179
  %v268 = vmul.f32 %v182, %v182
  %v269 = vmul.f32 %v187, %v187
  %v270 = vmul.f32 %v190, %v190
  %v271 = vmul.f32 %v195, %v195
  %v272 = vmul.f32 %v198, %v198
  %v273 = vmul.f32 %v203, %v203
  %v274 = vmul.f32 %v206, %v206
  %v275 = vmul.f32 %v211, %v211
  %v276 = vmul.f32 %v214, %v214
  %v277 = vmul.f32 %v219, %v219
  %v278 = vmul.f32 %v222, %v222
  %v279 = vmul.f32 %v227, %v227
  %v280 = vmul.f32 %v230, %v230
  %v281 = vadd.f32 %v265, %v266
  %v282 = vadd.f32 %v281, %v267
  %v283 = vadd.f32 %v282, %v268
  %v284 = vadd.f32 %v283, %v269
  %v285 = vadd.f32 %v284, %v270
  %v286 = vadd.f32 %v285, %v271
  %v287 = vadd.f32 %v286, %v272
  %v288 = vadd.f32 %v287, %v273
  %v289 = vadd.f32 %v288, %v274
  %v290 = vadd.f32 %v289, %v275
  %v291 = vadd.f32 %v290, %v276
  %v292 = vadd.f32 %v291, %v277
  %v293 = vadd.f32 %v292, %v278
  %v294 = vadd.f32 %v293, %v279
  %v295 = vadd.f32 %v294, %v280
  %296 = vst [vmem:[%s4] sm:$0xff] %v295
  // Predicated region
  $region10: #{resblock2_forward.8} parent=0 // pred_check
    _
  $region11: #{resblock2_forward.8} parent=0 // pred_check_branch
    %298 = sbr.rel (0) target = $region13
  $region12: #{resblock2_forward.8} parent=0 // pred_region
    _
  $region13: #{resblock2_forward.8} parent=0 // pred_fallthru
    _
  // Predicated region
  $region14: #{resblock2_forward.8} parent=0 // pred_check
    _
  $region15: #{resblock2_forward.8} parent=0 // pred_check_branch
    %300 = sbr.rel (0) target = $region17
  $region16: #{resblock2_forward.8} parent=0 // pred_region
    _
  $region17: #{resblock2_forward.8} parent=0 // pred_fallthru
    _
  // Predicated region
  $region18: #{resblock2_forward.8} parent=0 // pred_check
    _
  $region19: #{resblock2_forward.8} parent=0 // pred_check_branch
    %302 = sbr.rel (0) target = $region21
  $region20: #{resblock2_forward.8} parent=0 // pred_region
    _
  $region21: #{resblock2_forward.8} parent=0 // pred_fallthru
    _
  // Predicated region
  $region22: #{resblock2_forward.8} parent=0 // pred_check
    _
  $region23: #{resblock2_forward.8} parent=0 // pred_check_branch
    %304 = sbr.rel (0) target = $region25
  $region24: #{resblock2_forward.8} parent=0 // pred_region
    _
  $region25: #{resblock2_forward.8} parent=0 // pred_fallthru
    _
  // Predicated region
  $region26: #{resblock2_forward.8} parent=0 // pred_check
    _
  $region27: #{resblock2_forward.8} parent=0 // pred_check_branch
    %306 = sbr.rel (0) target = $region29
  $region28: #{resblock2_forward.8} parent=0 // pred_region
    _
  $region29: #{resblock2_forward.8} parent=0 // pred_fallthru
    _
  // Predicated region
  $region30: #{resblock2_forward.8} parent=0 // pred_check
    _
  $region31: #{resblock2_forward.8} parent=0 // pred_check_branch
    %308 = sbr.rel (0) target = $region33
  $region32: #{resblock2_forward.8} parent=0 // pred_region
    _
  $region33: #{resblock2_forward.8} parent=0 // pred_fallthru
    _

</llo_original>
